<compile_context>
chip_gen: v5e
topology: v5e:2x2
jax: 0.10.0
libtpu: 0.0.40
codegen_flags: <defaults>
</compile_context>

<pallas_src>
import math
import functools

import jax
import jax.numpy as jnp
from jax.experimental import pallas as pl
from jax.experimental.pallas import tpu as pltpu


def _layernorm(v, gamma, beta, eps=1e-5):
    mu = jnp.mean(v, axis=-1, keepdims=True)
    var = jnp.mean((v - mu) ** 2, axis=-1, keepdims=True)
    return (v - mu) * jax.lax.rsqrt(var + eps) * gamma + beta


def _gelu_exact(x):
    # nn.GELU() default = exact erf form (kept for PyTorch parity).
    return 0.5 * x * (1.0 + jax.lax.erf(x * (1.0 / math.sqrt(2.0))))


def transformer_block_kernel(
    # inputs -------------------------------------------------------------
    x_ref,                                   # (1, S, D)   f32
    ln1g_ref, ln1b_ref,                      # (1, D)      f32
    wq_ref,                                  # (H, D, hd)  cdt   head-major Q projection
    wk_ref, wv_ref,                          # (D, D)      cdt
    bq_ref,                                  # (H, 1, hd)  f32
    bk_ref, bv_ref,                          # (1, D)      f32
    wo_ref,                                  # (H, hd, D)  cdt   head-major out projection
    bo_ref,                                  # (1, D)      f32
    ln2g_ref, ln2b_ref,                      # (1, D)      f32
    w1_ref, b1_ref,                          # (D, Hmlp) cdt, (1, Hmlp) f32
    w2_ref, b2_ref,                          # (Hmlp, D) cdt, (1, D)    f32
    # outputs ------------------------------------------------------------
    o_ref,                                   # (1, TILE_S, D) f32
    # scratch ------------------------------------------------------------
    k_scr, v_scr,                            # (H, S, hd) cdt, persist across the row-tile axis
    *, num_heads, tile_s, compute_dtype,
):
    s_idx = pl.program_id(1)
    _, S, D = x_ref.shape
    H = num_heads
    hd = D // H
    cdt = compute_dtype
    scale = 1.0 / math.sqrt(hd)

    g1 = ln1g_ref[...]
    bt1 = ln1b_ref[...]

    # ---- stage K / V (head-major) once per batch element --------------------
    @pl.when(s_idx == 0)
    def _stage_kv():
        xn1_all = _layernorm(x_ref[0], g1, bt1).astype(cdt)                  # (S, D)
        k_all = (jnp.dot(xn1_all, wk_ref[...],
                         preferred_element_type=jnp.float32) + bk_ref[...]).astype(cdt)
        v_all = (jnp.dot(xn1_all, wv_ref[...],
                         preferred_element_type=jnp.float32) + bv_ref[...]).astype(cdt)
        for h in range(H):                   # layout staging only; amortized over all row tiles
            k_scr[h, :, :] = k_all[:, h * hd:(h + 1) * hd]
            v_scr[h, :, :] = v_all[:, h * hd:(h + 1) * hd]

    # ---- query-row tile ------------------------------------------------------
    row0 = pl.multiple_of(s_idx * tile_s, tile_s)
    x_t = x_ref[0, pl.ds(row0, tile_s), :]                                   # (T, D) f32
    xn1_t = _layernorm(x_t, g1, bt1)

    # Q projection batched over heads (leading batch dim; no slices/transposes).
    xq = jnp.broadcast_to(xn1_t.astype(cdt)[None], (H, tile_s, D))           # (H, T, D)
    q_h = jnp.einsum("hsd,hde->hse", xq, wq_ref[...],
                     preferred_element_type=jnp.float32) + bq_ref[...]       # (H, T, hd) f32
    q_h = (q_h * scale).astype(cdt)

    # Scores + softmax (f32 math).
    s_hqk = jnp.einsum("hqd,hkd->hqk", q_h, k_scr[...],
                       preferred_element_type=jnp.float32)                   # (H, T, S)
    s_hqk = s_hqk - jnp.max(s_hqk, axis=-1, keepdims=True)
    e = jnp.exp(s_hqk)
    p = e * pl.reciprocal(jnp.sum(e, axis=-1, keepdims=True), approx=True)

    ctx = jnp.einsum("hqk,hkd->hqd", p.astype(cdt), v_scr[...],
                     preferred_element_type=jnp.float32)                     # (H, T, hd)

    # Output projection per head with head-major Wo, then reduce over heads:
    # exactly equivalent to concat(ctx_heads) @ Wo^T without the lane-wise concat.
    attn_h = jnp.einsum("hqd,hde->hqe", ctx.astype(cdt), wo_ref[...],
                        preferred_element_type=jnp.float32)                  # (H, T, D)
    attn = attn_h[0]
    for h in range(1, H):
        attn = attn + attn_h[h]
    attn = attn + bo_ref[...]

    x1 = x_t + attn                                                          # residual 1

    # ---- MLP branch ----------------------------------------------------------
    xn2 = _layernorm(x1, ln2g_ref[...], ln2b_ref[...])
    h1 = jnp.dot(xn2.astype(cdt), w1_ref[...],
                 preferred_element_type=jnp.float32) + b1_ref[...]           # (T, Hmlp)
    h1 = _gelu_exact(h1)
    mlp = jnp.dot(h1.astype(cdt), w2_ref[...],
                  preferred_element_type=jnp.float32) + b2_ref[...]          # (T, D)

    o_ref[0] = (x1 + mlp).astype(o_ref.dtype)


_PARAM_ORDER = ("ln1_g", "ln1_b", "wq3", "wk_t", "wv_t", "bq3", "bk", "bv",
                "wo3", "b_o", "ln2_g", "ln2_b", "w1_t", "b1", "w2_t", "b2")


def transformer_block(x, kparams, *, num_heads, tile_s=None, compute_dtype=jnp.bfloat16):
    B, S, D = x.shape
    if D % num_heads != 0:
        raise ValueError("dim must be divisible by num_heads")
    hd = D // num_heads
    if tile_s is None:
        tile_s = S if S <= 128 else 128
    if S % tile_s != 0 or (tile_s != S and tile_s % 8 != 0):
        raise ValueError("tile_s must divide S and be a multiple of 8 (or equal S)")
    n_s = S // tile_s

    weight_args = [kparams[k] for k in _PARAM_ORDER]
    hidden = kparams["w1_t"].shape[1]

    x_spec = pl.BlockSpec((1, S, D), lambda b, s: (b, 0, 0))       # full seq resident per batch elem
    out_spec = pl.BlockSpec((1, tile_s, D), lambda b, s: (b, s, 0))

    def _resident_spec(arr):
        zeros = (0,) * arr.ndim                # constant block index -> fetched once, kept resident
        return pl.BlockSpec(arr.shape, lambda b, s, _z=zeros: _z)

    in_specs = [x_spec] + [_resident_spec(a) for a in weight_args]

    # Explicit VMEM budget computed from the tiles (clamped to v7x's 64 MiB physical VMEM).
    f32b = 4
    cb = jnp.dtype(compute_dtype).itemsize
    weight_bytes = sum(int(a.size) * a.dtype.itemsize for a in weight_args)
    scratch_bytes = 2 * num_heads * S * hd * cb
    io_bytes = 2 * S * D * f32b + 2 * 2 * tile_s * D * f32b
    interm_bytes = (num_heads * tile_s * S + num_heads * tile_s * D
                    + tile_s * hidden + 4 * tile_s * D + 2 * S * D) * f32b
    vmem_limit = int(min(max(2 * weight_bytes + scratch_bytes + io_bytes + 4 * interm_bytes,
                             16 * 1024 * 1024), 64 * 1024 * 1024))

    kernel = functools.partial(transformer_block_kernel,
                               num_heads=num_heads, tile_s=tile_s, compute_dtype=compute_dtype)

    return pl.pallas_call(
        kernel,
        out_shape=jax.ShapeDtypeStruct((B, S, D), jnp.float32),
        grid_spec=pltpu.PrefetchScalarGridSpec(
            num_scalar_prefetch=0,
            grid=(B, n_s),
            in_specs=in_specs,
            out_specs=out_spec,
            scratch_shapes=[pltpu.VMEM((num_heads, S, hd), compute_dtype),
                            pltpu.VMEM((num_heads, S, hd), compute_dtype)]),
        compiler_params=pltpu.CompilerParams(
            dimension_semantics=("parallel", "arbitrary"),
            vmem_limit_bytes=vmem_limit),
    )(x, *weight_args)


def init_params(key, dim, num_heads, mlp_ratio=4.0):
    """PyTorch-layout parameters (weights are (out_features, in_features))."""
    hidden = int(dim * mlp_ratio)
    ks = jax.random.split(key, 12)

    def kaiming(k, out_f, in_f):          # kaiming_normal_(nonlinearity='relu')
        return jax.random.normal(k, (out_f, in_f), jnp.float32) * math.sqrt(2.0 / in_f)

    lim = math.sqrt(6.0 / (dim + 3 * dim))   # xavier_uniform for in_proj_weight
    return {
        "ln1_g": 1.0 + 0.1 * jax.random.normal(ks[0], (dim,), jnp.float32),
        "ln1_b": 0.1 * jax.random.normal(ks[1], (dim,), jnp.float32),
        "w_qkv": jax.random.uniform(ks[2], (3 * dim, dim), jnp.float32, -lim, lim),
        "b_qkv": 0.1 * jax.random.normal(ks[3], (3 * dim,), jnp.float32),
        "w_o": kaiming(ks[4], dim, dim),
        "b_o": 0.1 * jax.random.normal(ks[5], (dim,), jnp.float32),
        "ln2_g": 1.0 + 0.1 * jax.random.normal(ks[6], (dim,), jnp.float32),
        "ln2_b": 0.1 * jax.random.normal(ks[7], (dim,), jnp.float32),
        "w1": kaiming(ks[8], hidden, dim),
        "b1": 0.1 * jax.random.normal(ks[9], (hidden,), jnp.float32),
        "w2": kaiming(ks[10], dim, hidden),
        "b2": 0.1 * jax.random.normal(ks[11], (dim,), jnp.float32),
    }


def prepare_kernel_params(params, num_heads, compute_dtype=jnp.bfloat16):
    """Host-side re-layout: transposed / head-major weights in the compute dtype."""
    dim = params["w_o"].shape[0]
    hd = dim // num_heads
    cdt = compute_dtype
    w_q = params["w_qkv"][0 * dim:1 * dim]
    w_k = params["w_qkv"][1 * dim:2 * dim]
    w_v = params["w_qkv"][2 * dim:3 * dim]
    b_q = params["b_qkv"][0 * dim:1 * dim]
    b_k = params["b_qkv"][1 * dim:2 * dim]
    b_v = params["b_qkv"][2 * dim:3 * dim]

    return {
        "ln1_g": params["ln1_g"].reshape(1, dim),
        "ln1_b": params["ln1_b"].reshape(1, dim),
        "wq3": jnp.transpose(w_q.reshape(num_heads, hd, dim), (0, 2, 1)).astype(cdt),  # (H, D, hd)
        "wk_t": jnp.transpose(w_k).astype(cdt),                                        # (D, D)
        "wv_t": jnp.transpose(w_v).astype(cdt),                                        # (D, D)
        "bq3": b_q.reshape(num_heads, 1, hd).astype(jnp.float32),
        "bk": b_k.reshape(1, dim),
        "bv": b_v.reshape(1, dim),
        "wo3": jnp.transpose(params["w_o"]).reshape(num_heads, hd, dim).astype(cdt),   # (H, hd, D)
        "b_o": params["b_o"].reshape(1, dim),
        "ln2_g": params["ln2_g"].reshape(1, dim),
        "ln2_b": params["ln2_b"].reshape(1, dim),
        "w1_t": jnp.transpose(params["w1"]).astype(cdt),                               # (D, hidden)
        "b1": params["b1"].reshape(1, -1),
        "w2_t": jnp.transpose(params["w2"]).astype(cdt),                               # (hidden, D)
        "b2": params["b2"].reshape(1, dim),
    }


def transformer_block_ref(x, params, num_heads):
    """Pure-JAX f32 reference with PyTorch-layout params (eval mode, dropout = identity)."""
    B, S, D = x.shape
    hd = D // num_heads

    def ln(v, g, b):
        mu = jnp.mean(v, -1, keepdims=True)
        var = jnp.mean((v - mu) ** 2, -1, keepdims=True)
        return (v - mu) / jnp.sqrt(var + 1e-5) * g + b

    xn1 = ln(x, params["ln1_g"], params["ln1_b"])
    qkv = xn1 @ params["w_qkv"].T + params["b_qkv"]
    q, k, v = jnp.split(qkv, 3, axis=-1)

    def heads(t):
        return t.reshape(B, S, num_heads, hd).transpose(0, 2, 1, 3)

    qh, kh, vh = heads(q), heads(k), heads(v)
    s = jnp.einsum("bhqd,bhkd->bhqk", qh, kh) / math.sqrt(hd)
    p = jax.nn.softmax(s, -1)
    ctx = jnp.einsum("bhqk,bhkd->bhqd", p, vh).transpose(0, 2, 1, 3).reshape(B, S, D)
    x1 = x + ctx @ params["w_o"].T + params["b_o"]

    xn2 = ln(x1, params["ln2_g"], params["ln2_b"])
    h = xn2 @ params["w1"].T + params["b1"]
    h = 0.5 * h * (1.0 + jax.lax.erf(h / math.sqrt(2.0)))
    return x1 + h @ params["w2"].T + params["b2"]


if __name__ == "__main__":
    B, S, D, NUM_HEADS = 2, 16, 32, 4      # toy shapes; 2 row tiles of 8 to exercise the S grid axis

    key = jax.random.PRNGKey(0)
    kx, kp = jax.random.split(key)
    x = jax.random.normal(kx, (B, S, D), jnp.float32)
    params = init_params(kp, D, NUM_HEADS, mlp_ratio=4.0)

    ref = jax.block_until_ready(transformer_block_ref(x, params, NUM_HEADS))

    # --- f32 compute path: parity check against the PyTorch-equivalent reference ---
    out_f32 = jax.block_until_ready(
        transformer_block(x, prepare_kernel_params(params, NUM_HEADS, jnp.float32),
                          num_heads=NUM_HEADS, tile_s=8, compute_dtype=jnp.float32))
    assert out_f32.shape == (B, S, D)
    err32 = float(jnp.max(jnp.abs(out_f32 - ref)))
    assert jnp.allclose(out_f32, ref, atol=1e-2, rtol=1e-2), err32

    # --- bf16 weights/activations on the MXU (f32 accumulation): perf configuration ---
    out_bf16 = jax.block_until_ready(
        transformer_block(x, prepare_kernel_params(params, NUM_HEADS, jnp.bfloat16),
                          num_heads=NUM_HEADS, tile_s=8, compute_dtype=jnp.bfloat16))
    assert out_bf16.shape == (B, S, D)
    rel_l2 = float(jnp.linalg.norm(out_bf16 - ref) / jnp.linalg.norm(ref))
    assert rel_l2 < 0.05, rel_l2           # bf16 quantization tolerance (relative L2)

    print("KERNEL_OK")
</pallas_src>

<mosaic_0001>
module attributes {stable_mosaic.version = 11 : i64} {
  func.func @transformer_block_kernel(%arg0: i32, %arg1: i32, %arg2: memref<1x16x32xf32, #tpu.memory_space<vmem>>, %arg3: memref<1x32xf32, #tpu.memory_space<vmem>>, %arg4: memref<1x32xf32, #tpu.memory_space<vmem>>, %arg5: memref<4x32x8xf32, #tpu.memory_space<vmem>>, %arg6: memref<32x32xf32, #tpu.memory_space<vmem>>, %arg7: memref<32x32xf32, #tpu.memory_space<vmem>>, %arg8: memref<4x1x8xf32, #tpu.memory_space<vmem>>, %arg9: memref<1x32xf32, #tpu.memory_space<vmem>>, %arg10: memref<1x32xf32, #tpu.memory_space<vmem>>, %arg11: memref<4x8x32xf32, #tpu.memory_space<vmem>>, %arg12: memref<1x32xf32, #tpu.memory_space<vmem>>, %arg13: memref<1x32xf32, #tpu.memory_space<vmem>>, %arg14: memref<1x32xf32, #tpu.memory_space<vmem>>, %arg15: memref<32x128xf32, #tpu.memory_space<vmem>>, %arg16: memref<1x128xf32, #tpu.memory_space<vmem>>, %arg17: memref<128x32xf32, #tpu.memory_space<vmem>>, %arg18: memref<1x32xf32, #tpu.memory_space<vmem>>, %arg19: memref<1x8x32xf32, #tpu.memory_space<vmem>>, %arg20: memref<4x16x8xf32, #tpu.memory_space<vmem>>, %arg21: memref<4x16x8xf32, #tpu.memory_space<vmem>>) attributes {dimension_semantics = [#tpu.dimension_semantics<parallel>, #tpu.dimension_semantics<arbitrary>], iteration_bounds = array<i64: 2, 2>, scalar_prefetch = 0 : i64, scratch_operands = 2 : i64, tpu.core_type = #tpu.core_type<tc>, window_params = [{transform_indices = @transform_0, window_bounds = array<i64: 1, 16, 32>}, {pipeline_mode = #tpu.pipeline_mode<synchronous>, transform_indices = @transform_1, window_bounds = array<i64: 1, 32>}, {pipeline_mode = #tpu.pipeline_mode<synchronous>, transform_indices = @transform_2, window_bounds = array<i64: 1, 32>}, {pipeline_mode = #tpu.pipeline_mode<synchronous>, transform_indices = @transform_3, window_bounds = array<i64: 4, 32, 8>}, {pipeline_mode = #tpu.pipeline_mode<synchronous>, transform_indices = @transform_4, window_bounds = array<i64: 32, 32>}, {pipeline_mode = #tpu.pipeline_mode<synchronous>, transform_indices = @transform_5, window_bounds = array<i64: 32, 32>}, {pipeline_mode = #tpu.pipeline_mode<synchronous>, transform_indices = @transform_6, window_bounds = array<i64: 4, 1, 8>}, {pipeline_mode = #tpu.pipeline_mode<synchronous>, transform_indices = @transform_7, window_bounds = array<i64: 1, 32>}, {pipeline_mode = #tpu.pipeline_mode<synchronous>, transform_indices = @transform_8, window_bounds = array<i64: 1, 32>}, {pipeline_mode = #tpu.pipeline_mode<synchronous>, transform_indices = @transform_9, window_bounds = array<i64: 4, 8, 32>}, {pipeline_mode = #tpu.pipeline_mode<synchronous>, transform_indices = @transform_10, window_bounds = array<i64: 1, 32>}, {pipeline_mode = #tpu.pipeline_mode<synchronous>, transform_indices = @transform_11, window_bounds = array<i64: 1, 32>}, {pipeline_mode = #tpu.pipeline_mode<synchronous>, transform_indices = @transform_12, window_bounds = array<i64: 1, 32>}, {pipeline_mode = #tpu.pipeline_mode<synchronous>, transform_indices = @transform_13, window_bounds = array<i64: 32, 128>}, {pipeline_mode = #tpu.pipeline_mode<synchronous>, transform_indices = @transform_14, window_bounds = array<i64: 1, 128>}, {pipeline_mode = #tpu.pipeline_mode<synchronous>, transform_indices = @transform_15, window_bounds = array<i64: 128, 32>}, {pipeline_mode = #tpu.pipeline_mode<synchronous>, transform_indices = @transform_16, window_bounds = array<i64: 1, 32>}, {transform_indices = @transform_17, window_bounds = array<i64: 1, 8, 32>}]} {
    %c0 = arith.constant 0 : index
    %c0_0 = arith.constant 0 : index
    %0 = vector.load %arg3[%c0, %c0_0] : memref<1x32xf32, #tpu.memory_space<vmem>>, vector<1x32xf32>
    %c0_1 = arith.constant 0 : index
    %c0_2 = arith.constant 0 : index
    %1 = vector.load %arg4[%c0_1, %c0_2] : memref<1x32xf32, #tpu.memory_space<vmem>>, vector<1x32xf32>
    %c0_i32 = arith.constant 0 : i32
    %2 = arith.cmpi eq, %arg1, %c0_i32 : i32
    %3 = arith.extui %2 : i1 to i32
    %c0_i32_3 = arith.constant 0 : i32
    %4 = arith.cmpi ne, %3, %c0_i32_3 : i32
    scf.if %4 {
      %c0_59 = arith.constant 0 : index
      %c0_60 = arith.constant 0 : index
      %c0_61 = arith.constant 0 : index
      %119 = vector.load %arg2[%c0_59, %c0_60, %c0_61] : memref<1x16x32xf32, #tpu.memory_space<vmem>>, vector<1x16x32xf32>
      %120 = vector.shape_cast %119 : vector<1x16x32xf32> to vector<16x32xf32>
      %cst_62 = arith.constant dense<0.000000e+00> : vector<16xf32>
      %121 = vector.multi_reduction <add>, %120, %cst_62 [1] : vector<16x32xf32> to vector<16xf32>
      %122 = vector.shape_cast %121 : vector<16xf32> to vector<16x1xf32>
      %cst_63 = arith.constant 3.200000e+01 : f32
      %123 = vector.broadcast %cst_63 : f32 to vector<16x1xf32>
      %124 = arith.divf %122, %123 : vector<16x1xf32>
      %125 = vector.broadcast %124 : vector<16x1xf32> to vector<16x32xf32>
      %126 = arith.subf %120, %125 : vector<16x32xf32>
      %127 = arith.mulf %126, %126 : vector<16x32xf32>
      %cst_64 = arith.constant dense<0.000000e+00> : vector<16xf32>
      %128 = vector.multi_reduction <add>, %127, %cst_64 [1] : vector<16x32xf32> to vector<16xf32>
      %129 = vector.shape_cast %128 : vector<16xf32> to vector<16x1xf32>
      %cst_65 = arith.constant 3.200000e+01 : f32
      %130 = vector.broadcast %cst_65 : f32 to vector<16x1xf32>
      %131 = arith.divf %129, %130 : vector<16x1xf32>
      %132 = vector.broadcast %124 : vector<16x1xf32> to vector<16x32xf32>
      %133 = arith.subf %120, %132 : vector<16x32xf32>
      %cst_66 = arith.constant 9.99999974E-6 : f32
      %134 = vector.broadcast %cst_66 : f32 to vector<16x1xf32>
      %135 = arith.addf %131, %134 : vector<16x1xf32>
      %136 = math.rsqrt %135 : vector<16x1xf32>
      %137 = vector.broadcast %136 : vector<16x1xf32> to vector<16x32xf32>
      %138 = arith.mulf %133, %137 : vector<16x32xf32>
      %139 = vector.broadcast %0 : vector<1x32xf32> to vector<16x32xf32>
      %140 = arith.mulf %138, %139 : vector<16x32xf32>
      %141 = vector.broadcast %1 : vector<1x32xf32> to vector<16x32xf32>
      %142 = arith.addf %140, %141 : vector<16x32xf32>
      %c0_67 = arith.constant 0 : index
      %c0_68 = arith.constant 0 : index
      %143 = vector.load %arg6[%c0_67, %c0_68] : memref<32x32xf32, #tpu.memory_space<vmem>>, vector<32x32xf32>
      %cst_69 = arith.constant dense<0.000000e+00> : vector<16x32xf32>
      %144 = tpu.matmul %142, %143, %cst_69 {dimension_numbers = #tpu.dot_dimension_numbers<[1], [0], [0], [1], [0, 0, 1, 1], [], []>} : vector<16x32xf32>, vector<32x32xf32>, vector<16x32xf32> -> vector<16x32xf32>
      %c0_70 = arith.constant 0 : index
      %c0_71 = arith.constant 0 : index
      %145 = vector.load %arg9[%c0_70, %c0_71] : memref<1x32xf32, #tpu.memory_space<vmem>>, vector<1x32xf32>
      %146 = vector.broadcast %145 : vector<1x32xf32> to vector<16x32xf32>
      %147 = arith.addf %144, %146 : vector<16x32xf32>
      %c0_72 = arith.constant 0 : index
      %c0_73 = arith.constant 0 : index
      %148 = vector.load %arg7[%c0_72, %c0_73] : memref<32x32xf32, #tpu.memory_space<vmem>>, vector<32x32xf32>
      %cst_74 = arith.constant dense<0.000000e+00> : vector<16x32xf32>
      %149 = tpu.matmul %142, %148, %cst_74 {dimension_numbers = #tpu.dot_dimension_numbers<[1], [0], [0], [1], [0, 0, 1, 1], [], []>} : vector<16x32xf32>, vector<32x32xf32>, vector<16x32xf32> -> vector<16x32xf32>
      %c0_75 = arith.constant 0 : index
      %c0_76 = arith.constant 0 : index
      %150 = vector.load %arg10[%c0_75, %c0_76] : memref<1x32xf32, #tpu.memory_space<vmem>>, vector<1x32xf32>
      %151 = vector.broadcast %150 : vector<1x32xf32> to vector<16x32xf32>
      %152 = arith.addf %149, %151 : vector<16x32xf32>
      %153 = vector.extract_strided_slice %147 {offsets = [0, 0], sizes = [16, 8], strides = [1, 1]} : vector<16x32xf32> to vector<16x8xf32>
      %c0_77 = arith.constant 0 : index
      %c0_78 = arith.constant 0 : index
      %c0_79 = arith.constant 0 : index
      %154 = vector.load %arg20[%c0_77, %c0_78, %c0_79] : memref<4x16x8xf32, #tpu.memory_space<vmem>>, vector<1x16x8xf32>
      %155 = vector.shape_cast %154 : vector<1x16x8xf32> to vector<16x8xf32>
      %156 = vector.shape_cast %153 : vector<16x8xf32> to vector<1x16x8xf32>
      tpu.vector_store %arg20[%c0_77, %c0_78, %c0_79], %156 {strides = array<i32>} : memref<4x16x8xf32, #tpu.memory_space<vmem>>, vector<1x16x8xf32>,
      %157 = vector.extract_strided_slice %152 {offsets = [0, 0], sizes = [16, 8], strides = [1, 1]} : vector<16x32xf32> to vector<16x8xf32>
      %c0_80 = arith.constant 0 : index
      %c0_81 = arith.constant 0 : index
      %c0_82 = arith.constant 0 : index
      %158 = vector.load %arg21[%c0_80, %c0_81, %c0_82] : memref<4x16x8xf32, #tpu.memory_space<vmem>>, vector<1x16x8xf32>
      %159 = vector.shape_cast %158 : vector<1x16x8xf32> to vector<16x8xf32>
      %160 = vector.shape_cast %157 : vector<16x8xf32> to vector<1x16x8xf32>
      tpu.vector_store %arg21[%c0_80, %c0_81, %c0_82], %160 {strides = array<i32>} : memref<4x16x8xf32, #tpu.memory_space<vmem>>, vector<1x16x8xf32>,
      %161 = vector.extract_strided_slice %147 {offsets = [0, 8], sizes = [16, 8], strides = [1, 1]} : vector<16x32xf32> to vector<16x8xf32>
      %c1 = arith.constant 1 : index
      %c0_83 = arith.constant 0 : index
      %c0_84 = arith.constant 0 : index
      %162 = vector.load %arg20[%c1, %c0_83, %c0_84] : memref<4x16x8xf32, #tpu.memory_space<vmem>>, vector<1x16x8xf32>
      %163 = vector.shape_cast %162 : vector<1x16x8xf32> to vector<16x8xf32>
      %164 = vector.shape_cast %161 : vector<16x8xf32> to vector<1x16x8xf32>
      tpu.vector_store %arg20[%c1, %c0_83, %c0_84], %164 {strides = array<i32>} : memref<4x16x8xf32, #tpu.memory_space<vmem>>, vector<1x16x8xf32>,
      %165 = vector.extract_strided_slice %152 {offsets = [0, 8], sizes = [16, 8], strides = [1, 1]} : vector<16x32xf32> to vector<16x8xf32>
      %c1_85 = arith.constant 1 : index
      %c0_86 = arith.constant 0 : index
      %c0_87 = arith.constant 0 : index
      %166 = vector.load %arg21[%c1_85, %c0_86, %c0_87] : memref<4x16x8xf32, #tpu.memory_space<vmem>>, vector<1x16x8xf32>
      %167 = vector.shape_cast %166 : vector<1x16x8xf32> to vector<16x8xf32>
      %168 = vector.shape_cast %165 : vector<16x8xf32> to vector<1x16x8xf32>
      tpu.vector_store %arg21[%c1_85, %c0_86, %c0_87], %168 {strides = array<i32>} : memref<4x16x8xf32, #tpu.memory_space<vmem>>, vector<1x16x8xf32>,
      %169 = vector.extract_strided_slice %147 {offsets = [0, 16], sizes = [16, 8], strides = [1, 1]} : vector<16x32xf32> to vector<16x8xf32>
      %c2 = arith.constant 2 : index
      %c0_88 = arith.constant 0 : index
      %c0_89 = arith.constant 0 : index
      %170 = vector.load %arg20[%c2, %c0_88, %c0_89] : memref<4x16x8xf32, #tpu.memory_space<vmem>>, vector<1x16x8xf32>
      %171 = vector.shape_cast %170 : vector<1x16x8xf32> to vector<16x8xf32>
      %172 = vector.shape_cast %169 : vector<16x8xf32> to vector<1x16x8xf32>
      tpu.vector_store %arg20[%c2, %c0_88, %c0_89], %172 {strides = array<i32>} : memref<4x16x8xf32, #tpu.memory_space<vmem>>, vector<1x16x8xf32>,
      %173 = vector.extract_strided_slice %152 {offsets = [0, 16], sizes = [16, 8], strides = [1, 1]} : vector<16x32xf32> to vector<16x8xf32>
      %c2_90 = arith.constant 2 : index
      %c0_91 = arith.constant 0 : index
      %c0_92 = arith.constant 0 : index
      %174 = vector.load %arg21[%c2_90, %c0_91, %c0_92] : memref<4x16x8xf32, #tpu.memory_space<vmem>>, vector<1x16x8xf32>
      %175 = vector.shape_cast %174 : vector<1x16x8xf32> to vector<16x8xf32>
      %176 = vector.shape_cast %173 : vector<16x8xf32> to vector<1x16x8xf32>
      tpu.vector_store %arg21[%c2_90, %c0_91, %c0_92], %176 {strides = array<i32>} : memref<4x16x8xf32, #tpu.memory_space<vmem>>, vector<1x16x8xf32>,
      %177 = vector.extract_strided_slice %147 {offsets = [0, 24], sizes = [16, 8], strides = [1, 1]} : vector<16x32xf32> to vector<16x8xf32>
      %c3 = arith.constant 3 : index
      %c0_93 = arith.constant 0 : index
      %c0_94 = arith.constant 0 : index
      %178 = vector.load %arg20[%c3, %c0_93, %c0_94] : memref<4x16x8xf32, #tpu.memory_space<vmem>>, vector<1x16x8xf32>
      %179 = vector.shape_cast %178 : vector<1x16x8xf32> to vector<16x8xf32>
      %180 = vector.shape_cast %177 : vector<16x8xf32> to vector<1x16x8xf32>
      tpu.vector_store %arg20[%c3, %c0_93, %c0_94], %180 {strides = array<i32>} : memref<4x16x8xf32, #tpu.memory_space<vmem>>, vector<1x16x8xf32>,
      %181 = vector.extract_strided_slice %152 {offsets = [0, 24], sizes = [16, 8], strides = [1, 1]} : vector<16x32xf32> to vector<16x8xf32>
      %c3_95 = arith.constant 3 : index
      %c0_96 = arith.constant 0 : index
      %c0_97 = arith.constant 0 : index
      %182 = vector.load %arg21[%c3_95, %c0_96, %c0_97] : memref<4x16x8xf32, #tpu.memory_space<vmem>>, vector<1x16x8xf32>
      %183 = vector.shape_cast %182 : vector<1x16x8xf32> to vector<16x8xf32>
      %184 = vector.shape_cast %181 : vector<16x8xf32> to vector<1x16x8xf32>
      tpu.vector_store %arg21[%c3_95, %c0_96, %c0_97], %184 {strides = array<i32>} : memref<4x16x8xf32, #tpu.memory_space<vmem>>, vector<1x16x8xf32>,
    } else {
    }
    %c8_i32 = arith.constant 8 : i32
    %5 = arith.muli %arg1, %c8_i32 : i32
    %6 = tpu.assume_multiple %5, 8 : i32
    %c0_4 = arith.constant 0 : index
    %7 = arith.index_cast %6 : i32 to index
    %c0_5 = arith.constant 0 : index
    %8 = vector.load %arg2[%c0_4, %7, %c0_5] : memref<1x16x32xf32, #tpu.memory_space<vmem>>, vector<1x8x32xf32>
    %9 = vector.shape_cast %8 : vector<1x8x32xf32> to vector<8x32xf32>
    %cst = arith.constant dense<0.000000e+00> : vector<8xf32>
    %10 = vector.multi_reduction <add>, %9, %cst [1] : vector<8x32xf32> to vector<8xf32>
    %11 = vector.shape_cast %10 : vector<8xf32> to vector<8x1xf32>
    %cst_6 = arith.constant 3.200000e+01 : f32
    %12 = vector.broadcast %cst_6 : f32 to vector<8x1xf32>
    %13 = arith.divf %11, %12 : vector<8x1xf32>
    %14 = vector.broadcast %13 : vector<8x1xf32> to vector<8x32xf32>
    %15 = arith.subf %9, %14 : vector<8x32xf32>
    %16 = arith.mulf %15, %15 : vector<8x32xf32>
    %cst_7 = arith.constant dense<0.000000e+00> : vector<8xf32>
    %17 = vector.multi_reduction <add>, %16, %cst_7 [1] : vector<8x32xf32> to vector<8xf32>
    %18 = vector.shape_cast %17 : vector<8xf32> to vector<8x1xf32>
    %cst_8 = arith.constant 3.200000e+01 : f32
    %19 = vector.broadcast %cst_8 : f32 to vector<8x1xf32>
    %20 = arith.divf %18, %19 : vector<8x1xf32>
    %21 = vector.broadcast %13 : vector<8x1xf32> to vector<8x32xf32>
    %22 = arith.subf %9, %21 : vector<8x32xf32>
    %cst_9 = arith.constant 9.99999974E-6 : f32
    %23 = vector.broadcast %cst_9 : f32 to vector<8x1xf32>
    %24 = arith.addf %20, %23 : vector<8x1xf32>
    %25 = math.rsqrt %24 : vector<8x1xf32>
    %26 = vector.broadcast %25 : vector<8x1xf32> to vector<8x32xf32>
    %27 = arith.mulf %22, %26 : vector<8x32xf32>
    %28 = vector.broadcast %0 : vector<1x32xf32> to vector<8x32xf32>
    %29 = arith.mulf %27, %28 : vector<8x32xf32>
    %30 = vector.broadcast %1 : vector<1x32xf32> to vector<8x32xf32>
    %31 = arith.addf %29, %30 : vector<8x32xf32>
    %32 = vector.shape_cast %31 : vector<8x32xf32> to vector<1x8x32xf32>
    %33 = vector.shape_cast %32 : vector<1x8x32xf32> to vector<1x8x32xf32>
    %34 = vector.broadcast %33 : vector<1x8x32xf32> to vector<4x8x32xf32>
    %c0_10 = arith.constant 0 : index
    %c0_11 = arith.constant 0 : index
    %c0_12 = arith.constant 0 : index
    %35 = vector.load %arg5[%c0_10, %c0_11, %c0_12] : memref<4x32x8xf32, #tpu.memory_space<vmem>>, vector<4x32x8xf32>
    "tpu.trace_start"() <{level = 10 : i32, message = "hsd,hde->hse"}> : () -> ()
    %cst_13 = arith.constant dense<0.000000e+00> : vector<4x8x8xf32>
    %36 = tpu.matmul %34, %35, %cst_13 {dimension_numbers = #tpu.dot_dimension_numbers<[2], [1], [1], [2], [0, 0, 0, 1, 1, 2], [0], [0]>} : vector<4x8x32xf32>, vector<4x32x8xf32>, vector<4x8x8xf32> -> vector<4x8x8xf32>
    "tpu.trace_stop"() : () -> ()
    %c0_14 = arith.constant 0 : index
    %c0_15 = arith.constant 0 : index
    %c0_16 = arith.constant 0 : index
    %37 = vector.load %arg8[%c0_14, %c0_15, %c0_16] : memref<4x1x8xf32, #tpu.memory_space<vmem>>, vector<4x1x8xf32>
    %38 = vector.broadcast %37 : vector<4x1x8xf32> to vector<4x8x8xf32>
    %39 = arith.addf %36, %38 : vector<4x8x8xf32>
    %cst_17 = arith.constant 0.353553385 : f32
    %40 = vector.broadcast %cst_17 : f32 to vector<4x8x8xf32>
    %41 = arith.mulf %39, %40 : vector<4x8x8xf32>
    %c0_18 = arith.constant 0 : index
    %c0_19 = arith.constant 0 : index
    %c0_20 = arith.constant 0 : index
    %42 = vector.load %arg20[%c0_18, %c0_19, %c0_20] : memref<4x16x8xf32, #tpu.memory_space<vmem>>, vector<4x16x8xf32>
    "tpu.trace_start"() <{level = 10 : i32, message = "hqd,hkd->hqk"}> : () -> ()
    %cst_21 = arith.constant dense<0.000000e+00> : vector<4x8x16xf32>
    %43 = tpu.matmul %41, %42, %cst_21 {dimension_numbers = #tpu.dot_dimension_numbers<[2], [2], [1], [1], [0, 0, 0, 1, 1, 1], [0], [0]>} : vector<4x8x8xf32>, vector<4x16x8xf32>, vector<4x8x16xf32> -> vector<4x8x16xf32>
    "tpu.trace_stop"() : () -> ()
    %cst_22 = arith.constant dense<0xFF800000> : vector<4x8xf32>
    %44 = vector.multi_reduction <maximumf>, %43, %cst_22 [2] : vector<4x8x16xf32> to vector<4x8xf32>
    %45 = vector.shape_cast %44 : vector<4x8xf32> to vector<4x8x1xf32>
    %46 = vector.broadcast %45 : vector<4x8x1xf32> to vector<4x8x16xf32>
    %47 = arith.subf %43, %46 : vector<4x8x16xf32>
    %48 = math.exp %47 : vector<4x8x16xf32>
    %cst_23 = arith.constant dense<0.000000e+00> : vector<4x8xf32>
    %49 = vector.multi_reduction <add>, %48, %cst_23 [2] : vector<4x8x16xf32> to vector<4x8xf32>
    %50 = vector.shape_cast %49 : vector<4x8xf32> to vector<4x8x1xf32>
    %51 = tpu.reciprocal %50 {approx = true} : vector<4x8x1xf32> -> vector<4x8x1xf32>
    %52 = vector.broadcast %51 : vector<4x8x1xf32> to vector<4x8x16xf32>
    %53 = arith.mulf %48, %52 : vector<4x8x16xf32>
    %c0_24 = arith.constant 0 : index
    %c0_25 = arith.constant 0 : index
    %c0_26 = arith.constant 0 : index
    %54 = vector.load %arg21[%c0_24, %c0_25, %c0_26] : memref<4x16x8xf32, #tpu.memory_space<vmem>>, vector<4x16x8xf32>
    "tpu.trace_start"() <{level = 10 : i32, message = "hqk,hkd->hqd"}> : () -> ()
    %cst_27 = arith.constant dense<0.000000e+00> : vector<4x8x8xf32>
    %55 = tpu.matmul %53, %54, %cst_27 {dimension_numbers = #tpu.dot_dimension_numbers<[2], [1], [1], [2], [0, 0, 0, 1, 1, 2], [0], [0]>} : vector<4x8x16xf32>, vector<4x16x8xf32>, vector<4x8x8xf32> -> vector<4x8x8xf32>
    "tpu.trace_stop"() : () -> ()
    %c0_28 = arith.constant 0 : index
    %c0_29 = arith.constant 0 : index
    %c0_30 = arith.constant 0 : index
    %56 = vector.load %arg11[%c0_28, %c0_29, %c0_30] : memref<4x8x32xf32, #tpu.memory_space<vmem>>, vector<4x8x32xf32>
    "tpu.trace_start"() <{level = 10 : i32, message = "hqd,hde->hqe"}> : () -> ()
    %cst_31 = arith.constant dense<0.000000e+00> : vector<4x8x32xf32>
    %57 = tpu.matmul %55, %56, %cst_31 {dimension_numbers = #tpu.dot_dimension_numbers<[2], [1], [1], [2], [0, 0, 0, 1, 1, 2], [0], [0]>} : vector<4x8x8xf32>, vector<4x8x32xf32>, vector<4x8x32xf32> -> vector<4x8x32xf32>
    "tpu.trace_stop"() : () -> ()
    %58 = vector.extract_strided_slice %57 {offsets = [0, 0, 0], sizes = [1, 8, 32], strides = [1, 1, 1]} : vector<4x8x32xf32> to vector<1x8x32xf32>
    %59 = vector.shape_cast %58 : vector<1x8x32xf32> to vector<8x32xf32>
    %60 = vector.extract_strided_slice %57 {offsets = [1, 0, 0], sizes = [1, 8, 32], strides = [1, 1, 1]} : vector<4x8x32xf32> to vector<1x8x32xf32>
    %61 = vector.shape_cast %60 : vector<1x8x32xf32> to vector<8x32xf32>
    %62 = arith.addf %59, %61 : vector<8x32xf32>
    %63 = vector.extract_strided_slice %57 {offsets = [2, 0, 0], sizes = [1, 8, 32], strides = [1, 1, 1]} : vector<4x8x32xf32> to vector<1x8x32xf32>
    %64 = vector.shape_cast %63 : vector<1x8x32xf32> to vector<8x32xf32>
    %65 = arith.addf %62, %64 : vector<8x32xf32>
    %66 = vector.extract_strided_slice %57 {offsets = [3, 0, 0], sizes = [1, 8, 32], strides = [1, 1, 1]} : vector<4x8x32xf32> to vector<1x8x32xf32>
    %67 = vector.shape_cast %66 : vector<1x8x32xf32> to vector<8x32xf32>
    %68 = arith.addf %65, %67 : vector<8x32xf32>
    %c0_32 = arith.constant 0 : index
    %c0_33 = arith.constant 0 : index
    %69 = vector.load %arg12[%c0_32, %c0_33] : memref<1x32xf32, #tpu.memory_space<vmem>>, vector<1x32xf32>
    %70 = vector.broadcast %69 : vector<1x32xf32> to vector<8x32xf32>
    %71 = arith.addf %68, %70 : vector<8x32xf32>
    %72 = arith.addf %9, %71 : vector<8x32xf32>
    %c0_34 = arith.constant 0 : index
    %c0_35 = arith.constant 0 : index
    %73 = vector.load %arg13[%c0_34, %c0_35] : memref<1x32xf32, #tpu.memory_space<vmem>>, vector<1x32xf32>
    %c0_36 = arith.constant 0 : index
    %c0_37 = arith.constant 0 : index
    %74 = vector.load %arg14[%c0_36, %c0_37] : memref<1x32xf32, #tpu.memory_space<vmem>>, vector<1x32xf32>
    %cst_38 = arith.constant dense<0.000000e+00> : vector<8xf32>
    %75 = vector.multi_reduction <add>, %72, %cst_38 [1] : vector<8x32xf32> to vector<8xf32>
    %76 = vector.shape_cast %75 : vector<8xf32> to vector<8x1xf32>
    %cst_39 = arith.constant 3.200000e+01 : f32
    %77 = vector.broadcast %cst_39 : f32 to vector<8x1xf32>
    %78 = arith.divf %76, %77 : vector<8x1xf32>
    %79 = vector.broadcast %78 : vector<8x1xf32> to vector<8x32xf32>
    %80 = arith.subf %72, %79 : vector<8x32xf32>
    %81 = arith.mulf %80, %80 : vector<8x32xf32>
    %cst_40 = arith.constant dense<0.000000e+00> : vector<8xf32>
    %82 = vector.multi_reduction <add>, %81, %cst_40 [1] : vector<8x32xf32> to vector<8xf32>
    %83 = vector.shape_cast %82 : vector<8xf32> to vector<8x1xf32>
    %cst_41 = arith.constant 3.200000e+01 : f32
    %84 = vector.broadcast %cst_41 : f32 to vector<8x1xf32>
    %85 = arith.divf %83, %84 : vector<8x1xf32>
    %86 = vector.broadcast %78 : vector<8x1xf32> to vector<8x32xf32>
    %87 = arith.subf %72, %86 : vector<8x32xf32>
    %cst_42 = arith.constant 9.99999974E-6 : f32
    %88 = vector.broadcast %cst_42 : f32 to vector<8x1xf32>
    %89 = arith.addf %85, %88 : vector<8x1xf32>
    %90 = math.rsqrt %89 : vector<8x1xf32>
    %91 = vector.broadcast %90 : vector<8x1xf32> to vector<8x32xf32>
    %92 = arith.mulf %87, %91 : vector<8x32xf32>
    %93 = vector.broadcast %73 : vector<1x32xf32> to vector<8x32xf32>
    %94 = arith.mulf %92, %93 : vector<8x32xf32>
    %95 = vector.broadcast %74 : vector<1x32xf32> to vector<8x32xf32>
    %96 = arith.addf %94, %95 : vector<8x32xf32>
    %c0_43 = arith.constant 0 : index
    %c0_44 = arith.constant 0 : index
    %97 = vector.load %arg15[%c0_43, %c0_44] : memref<32x128xf32, #tpu.memory_space<vmem>>, vector<32x128xf32>
    %cst_45 = arith.constant dense<0.000000e+00> : vector<8x128xf32>
    %98 = tpu.matmul %96, %97, %cst_45 {dimension_numbers = #tpu.dot_dimension_numbers<[1], [0], [0], [1], [0, 0, 1, 1], [], []>} : vector<8x32xf32>, vector<32x128xf32>, vector<8x128xf32> -> vector<8x128xf32>
    %c0_46 = arith.constant 0 : index
    %c0_47 = arith.constant 0 : index
    %99 = vector.load %arg16[%c0_46, %c0_47] : memref<1x128xf32, #tpu.memory_space<vmem>>, vector<1x128xf32>
    %100 = vector.broadcast %99 : vector<1x128xf32> to vector<8x128xf32>
    %101 = arith.addf %98, %100 : vector<8x128xf32>
    %cst_48 = arith.constant 5.000000e-01 : f32
    %102 = vector.broadcast %cst_48 : f32 to vector<8x128xf32>
    %103 = arith.mulf %102, %101 : vector<8x128xf32>
    %cst_49 = arith.constant 0.707106769 : f32
    %104 = vector.broadcast %cst_49 : f32 to vector<8x128xf32>
    %105 = arith.mulf %101, %104 : vector<8x128xf32>
    %106 = math.erf %105 : vector<8x128xf32>
    %cst_50 = arith.constant 1.000000e+00 : f32
    %107 = vector.broadcast %cst_50 : f32 to vector<8x128xf32>
    %108 = arith.addf %107, %106 : vector<8x128xf32>
    %109 = arith.mulf %103, %108 : vector<8x128xf32>
    %c0_51 = arith.constant 0 : index
    %c0_52 = arith.constant 0 : index
    %110 = vector.load %arg17[%c0_51, %c0_52] : memref<128x32xf32, #tpu.memory_space<vmem>>, vector<128x32xf32>
    %cst_53 = arith.constant dense<0.000000e+00> : vector<8x32xf32>
    %111 = tpu.matmul %109, %110, %cst_53 {dimension_numbers = #tpu.dot_dimension_numbers<[1], [0], [0], [1], [0, 0, 1, 1], [], []>} : vector<8x128xf32>, vector<128x32xf32>, vector<8x32xf32> -> vector<8x32xf32>
    %c0_54 = arith.constant 0 : index
    %c0_55 = arith.constant 0 : index
    %112 = vector.load %arg18[%c0_54, %c0_55] : memref<1x32xf32, #tpu.memory_space<vmem>>, vector<1x32xf32>
    %113 = vector.broadcast %112 : vector<1x32xf32> to vector<8x32xf32>
    %114 = arith.addf %111, %113 : vector<8x32xf32>
    %115 = arith.addf %72, %114 : vector<8x32xf32>
    %c0_56 = arith.constant 0 : index
    %c0_57 = arith.constant 0 : index
    %c0_58 = arith.constant 0 : index
    %116 = vector.load %arg19[%c0_56, %c0_57, %c0_58] : memref<1x8x32xf32, #tpu.memory_space<vmem>>, vector<1x8x32xf32>
    %117 = vector.shape_cast %116 : vector<1x8x32xf32> to vector<8x32xf32>
    %118 = vector.shape_cast %115 : vector<8x32xf32> to vector<1x8x32xf32>
    tpu.vector_store %arg19[%c0_56, %c0_57, %c0_58], %118 {strides = array<i32>} : memref<1x8x32xf32, #tpu.memory_space<vmem>>, vector<1x8x32xf32>,
    return
  }
  func.func @transform_0(%arg0: i32, %arg1: i32) -> (i32, i32, i32) {
    %c0_i32 = arith.constant 0 : i32
    %c0_i32_0 = arith.constant 0 : i32
    %c0_i32_1 = arith.constant 0 : i32
    return %arg0, %c0_i32, %c0_i32_0 : i32, i32, i32
  }
  func.func @transform_1(%arg0: i32, %arg1: i32) -> (i32, i32) {
    %c0_i32 = arith.constant 0 : i32
    %c0_i32_0 = arith.constant 0 : i32
    %c0_i32_1 = arith.constant 0 : i32
    return %c0_i32, %c0_i32_0 : i32, i32
  }
  func.func @transform_2(%arg0: i32, %arg1: i32) -> (i32, i32) {
    %c0_i32 = arith.constant 0 : i32
    %c0_i32_0 = arith.constant 0 : i32
    %c0_i32_1 = arith.constant 0 : i32
    return %c0_i32, %c0_i32_0 : i32, i32
  }
  func.func @transform_3(%arg0: i32, %arg1: i32) -> (i32, i32, i32) {
    %c0_i32 = arith.constant 0 : i32
    %c0_i32_0 = arith.constant 0 : i32
    %c0_i32_1 = arith.constant 0 : i32
    %c0_i32_2 = arith.constant 0 : i32
    return %c0_i32, %c0_i32_0, %c0_i32_1 : i32, i32, i32
  }
  func.func @transform_4(%arg0: i32, %arg1: i32) -> (i32, i32) {
    %c0_i32 = arith.constant 0 : i32
    %c0_i32_0 = arith.constant 0 : i32
    %c0_i32_1 = arith.constant 0 : i32
    return %c0_i32, %c0_i32_0 : i32, i32
  }
  func.func @transform_5(%arg0: i32, %arg1: i32) -> (i32, i32) {
    %c0_i32 = arith.constant 0 : i32
    %c0_i32_0 = arith.constant 0 : i32
    %c0_i32_1 = arith.constant 0 : i32
    return %c0_i32, %c0_i32_0 : i32, i32
  }
  func.func @transform_6(%arg0: i32, %arg1: i32) -> (i32, i32, i32) {
    %c0_i32 = arith.constant 0 : i32
    %c0_i32_0 = arith.constant 0 : i32
    %c0_i32_1 = arith.constant 0 : i32
    %c0_i32_2 = arith.constant 0 : i32
    return %c0_i32, %c0_i32_0, %c0_i32_1 : i32, i32, i32
  }
  func.func @transform_7(%arg0: i32, %arg1: i32) -> (i32, i32) {
    %c0_i32 = arith.constant 0 : i32
    %c0_i32_0 = arith.constant 0 : i32
    %c0_i32_1 = arith.constant 0 : i32
    return %c0_i32, %c0_i32_0 : i32, i32
  }
  func.func @transform_8(%arg0: i32, %arg1: i32) -> (i32, i32) {
    %c0_i32 = arith.constant 0 : i32
    %c0_i32_0 = arith.constant 0 : i32
    %c0_i32_1 = arith.constant 0 : i32
    return %c0_i32, %c0_i32_0 : i32, i32
  }
  func.func @transform_9(%arg0: i32, %arg1: i32) -> (i32, i32, i32) {
    %c0_i32 = arith.constant 0 : i32
    %c0_i32_0 = arith.constant 0 : i32
    %c0_i32_1 = arith.constant 0 : i32
    %c0_i32_2 = arith.constant 0 : i32
    return %c0_i32, %c0_i32_0, %c0_i32_1 : i32, i32, i32
  }
  func.func @transform_10(%arg0: i32, %arg1: i32) -> (i32, i32) {
    %c0_i32 = arith.constant 0 : i32
    %c0_i32_0 = arith.constant 0 : i32
    %c0_i32_1 = arith.constant 0 : i32
    return %c0_i32, %c0_i32_0 : i32, i32
  }
  func.func @transform_11(%arg0: i32, %arg1: i32) -> (i32, i32) {
    %c0_i32 = arith.constant 0 : i32
    %c0_i32_0 = arith.constant 0 : i32
    %c0_i32_1 = arith.constant 0 : i32
    return %c0_i32, %c0_i32_0 : i32, i32
  }
  func.func @transform_12(%arg0: i32, %arg1: i32) -> (i32, i32) {
    %c0_i32 = arith.constant 0 : i32
    %c0_i32_0 = arith.constant 0 : i32
    %c0_i32_1 = arith.constant 0 : i32
    return %c0_i32, %c0_i32_0 : i32, i32
  }
  func.func @transform_13(%arg0: i32, %arg1: i32) -> (i32, i32) {
    %c0_i32 = arith.constant 0 : i32
    %c0_i32_0 = arith.constant 0 : i32
    %c0_i32_1 = arith.constant 0 : i32
    return %c0_i32, %c0_i32_0 : i32, i32
  }
  func.func @transform_14(%arg0: i32, %arg1: i32) -> (i32, i32) {
    %c0_i32 = arith.constant 0 : i32
    %c0_i32_0 = arith.constant 0 : i32
    %c0_i32_1 = arith.constant 0 : i32
    return %c0_i32, %c0_i32_0 : i32, i32
  }
  func.func @transform_15(%arg0: i32, %arg1: i32) -> (i32, i32) {
    %c0_i32 = arith.constant 0 : i32
    %c0_i32_0 = arith.constant 0 : i32
    %c0_i32_1 = arith.constant 0 : i32
    return %c0_i32, %c0_i32_0 : i32, i32
  }
  func.func @transform_16(%arg0: i32, %arg1: i32) -> (i32, i32) {
    %c0_i32 = arith.constant 0 : i32
    %c0_i32_0 = arith.constant 0 : i32
    %c0_i32_1 = arith.constant 0 : i32
    return %c0_i32, %c0_i32_0 : i32, i32
  }
  func.func @transform_17(%arg0: i32, %arg1: i32) -> (i32, i32, i32) {
    %c0_i32 = arith.constant 0 : i32
    %c0_i32_0 = arith.constant 0 : i32
    return %arg0, %arg1, %c0_i32 : i32, i32, i32
  }
}

</mosaic_0001>

<llo_original>
// kernel: tpu_custom_call.1
$region0: #{tpu_custom_call.1}
  #allocation0 [shape = 'u32[]', space=smem, size = 0x4, offset = 0x4, fixed_abs, tag = 'smem constant byte address 0x4 - core index']
  #allocation1 [shape = 'u32[72,128]{1,0:T(1,128)}', space=vmem, size = 0x9000, scoped, tag = 'internal scratch']
  #allocation2 [shape = 'f32[4,16,8]{2,1,0:T(8,128)}', space=vmem, size = 0x8000, scoped, tag = 'scratch operand']
  #allocation3 [shape = 'f32[4,16,8]{2,1,0:T(8,128)}', space=vmem, size = 0x8000, scoped, tag = 'scratch operand']
  %s0 = inlined_call_operand.vmem [shape: f32[2,16,32], index: 0, kind: input, shape index: {}]
  %s1 = inlined_call_operand.vmem [shape: f32[1,32], index: 1, kind: input, shape index: {}]
  %s2 = inlined_call_operand.vmem [shape: f32[1,32], index: 2, kind: input, shape index: {}]
  %s3 = inlined_call_operand.vmem [shape: f32[4,32,8], index: 3, kind: input, shape index: {}]
  %s4 = inlined_call_operand.vmem [shape: f32[32,32], index: 4, kind: input, shape index: {}]
  %s5 = inlined_call_operand.vmem [shape: f32[32,32], index: 5, kind: input, shape index: {}]
  %s6 = inlined_call_operand.vmem [shape: f32[4,1,8], index: 6, kind: input, shape index: {}]
  %s7 = inlined_call_operand.vmem [shape: f32[1,32], index: 7, kind: input, shape index: {}]
  %s8 = inlined_call_operand.vmem [shape: f32[1,32], index: 8, kind: input, shape index: {}]
  %s9 = inlined_call_operand.vmem [shape: f32[4,8,32], index: 9, kind: input, shape index: {}]
  %s10 = inlined_call_operand.vmem [shape: f32[1,32], index: 10, kind: input, shape index: {}]
  %s11 = inlined_call_operand.vmem [shape: f32[1,32], index: 11, kind: input, shape index: {}]
  %s12 = inlined_call_operand.vmem [shape: f32[1,32], index: 12, kind: input, shape index: {}]
  %s13 = inlined_call_operand.vmem [shape: f32[32,128], index: 13, kind: input, shape index: {}]
  %s14 = inlined_call_operand.vmem [shape: f32[1,128], index: 14, kind: input, shape index: {}]
  %s15 = inlined_call_operand.vmem [shape: f32[128,32], index: 15, kind: input, shape index: {}]
  %s16 = inlined_call_operand.vmem [shape: f32[1,32], index: 16, kind: input, shape index: {}]
  %s17 = inlined_call_operand.hbm [shape: f32[2,16,32], index: 17, kind: output, shape index: {}]
  %s18 = sld [smem:[#allocation0]]
  $region105: #{tpu_custom_call.1} parent=0
    _
  %s20 = ssub.s32 1, %s18
  %s21 = scalar_select 0, %s20, %s18
  $region1: #{tpu_custom_call.1} parent=0
    #allocation4 [shape = 'u8[8192]{0}', space=vmem, size = 0x2000, scoped, tag = 'output window, operand 0']
    #allocation5 [shape = 's32[2]{0}', space=sflag, size = 0x8, scoped, tag = 'scoped memory for tpu_custom_call.1']
    %22 = vsyncpa [#allocation5], 0
    %s23 = scalar_lea.sflag [#allocation5], 1
    %24 = vsyncpa %s23, 0
    loop: start=0, step=1, limit=6
    $region2: #{tpu_custom_call.1} parent=1 // loop_pre_header
      _
    $region3: #{tpu_custom_call.1} parent=1 // loop_header
      %s26 = sphi 0, %s30
      %p27 = scmp.ge.s32.totalorder %s26, 6
      %s33 = sphi 0, %s45
      %s34 = sphi 0, %s41
      %s35 = sphi 0, %s33
      %s36 = sphi 0, %s34
      %s37 = sphi 0, %s35
      %s38 = sphi 0, %s36
      %s48 = sphi 0, %s50
      %s51 = sphi 0, %s48
      %s52 = sphi 0, %s51
      %s68 = sphi 0, %s52
      %s72 = sphi 0, %s72
      %s74 = sphi 0, %s72
      %s75 = sphi 0, %s74
      %s89 = sphi 0, %s75
      %s93 = sphi 0, %s93
      %s95 = sphi 0, %s93
      %s96 = sphi 0, %s95
      %s110 = sphi 0, %s96
      %s114 = sphi 0, %s114
      %s116 = sphi 0, %s114
      %s117 = sphi 0, %s116
      %s131 = sphi 0, %s117
      %s135 = sphi 0, %s135
      %s137 = sphi 0, %s135
      %s138 = sphi 0, %s137
      %s152 = sphi 0, %s138
      %s156 = sphi 0, %s156
      %s158 = sphi 0, %s156
      %s159 = sphi 0, %s158
      %s173 = sphi 0, %s159
      %s177 = sphi 0, %s177
      %s179 = sphi 0, %s177
      %s180 = sphi 0, %s179
      %s194 = sphi 0, %s180
      %s198 = sphi 0, %s198
      %s200 = sphi 0, %s198
      %s201 = sphi 0, %s200
      %s215 = sphi 0, %s201
      %s219 = sphi 0, %s219
      %s221 = sphi 0, %s219
      %s222 = sphi 0, %s221
      %s236 = sphi 0, %s222
      %s240 = sphi 0, %s240
      %s242 = sphi 0, %s240
      %s243 = sphi 0, %s242
      %s257 = sphi 0, %s243
      %s261 = sphi 0, %s261
      %s263 = sphi 0, %s261
      %s264 = sphi 0, %s263
      %s278 = sphi 0, %s264
      %s282 = sphi 0, %s282
      %s284 = sphi 0, %s282
      %s285 = sphi 0, %s284
      %s299 = sphi 0, %s285
      %s303 = sphi 0, %s303
      %s305 = sphi 0, %s303
      %s306 = sphi 0, %s305
      %s320 = sphi 0, %s306
      %s324 = sphi 0, %s324
      %s326 = sphi 0, %s324
      %s327 = sphi 0, %s326
      %s341 = sphi 0, %s327
      %s345 = sphi 0, %s345
      %s347 = sphi 0, %s345
      %s348 = sphi 0, %s347
      %s362 = sphi 0, %s348
      %s366 = sphi 0, %s366
      %s368 = sphi 0, %s366
      %s369 = sphi 0, %s368
      %s383 = sphi 0, %s369
      %s387 = sphi 0, %s387
      %s389 = sphi 0, %s387
      %s390 = sphi 0, %s389
      %s404 = sphi 0, %s390
      %s412 = sphi 0, %s414
      %s415 = sphi 0, %s412
      %s416 = sphi 0, %s415
      %s432 = sphi 0, %s416
    $region4: #{tpu_custom_call.1} parent=1 // loop_header_branch
      %29 = sbr.rel (%p27) target = $region8
    $region5: #{tpu_custom_call.1} parent=1 // loop_body
      %s31 = ssub.s32 %s26, 1
      %s32 = ssub.s32 %s26, 2
      %s39 = sadd.s32 1, %s34
      %p40 = scmp.ge.s32.totalorder %s39, 2
      %s41 = scalar_select %p40, 0, %s39
      %s42 = sadd.s32 1, %s33
      %s43 = scalar_select %p40, %s42, %s33
      %p44 = scmp.ge.s32.totalorder %s43, 2
      %s45 = scalar_select %p44, 0, %s43
      %s46 = ssub.s32 %s33, %s45
      %p47 = scmp.eq.s32.totalorder %s46, 0
      %s49 = sadd.s32 %s48, 1
      %s50 = scalar_select %p47, %s48, %s49
      %p53 = pneg %p47
      %p54 = scmp.eq.s32.totalorder %s26, 3
      %p55 = por %p53, %p54
      %p56 = scmp.ne.s32.totalorder %s48, %s51
      %p57 = scmp.eq.s32.totalorder %s26, 0
      %p58 = por %p56, %p57
      %p59 = scmp.ne.s32.totalorder %s48, %s51
      %p60 = scmp.eq.s32.totalorder %s31, 3
      %p61 = por %p59, %p60
      %p62 = scmp.ne.s32.totalorder %s51, %s52
      %p63 = scmp.eq.s32.totalorder %s31, 0
      %p64 = por %p62, %p63
      %p65 = scmp.ne.s32.totalorder %s51, %s52
      %p66 = scmp.eq.s32.totalorder %s32, 3
      %p67 = por %p65, %p66
      %p69 = scmp.ne.s32.totalorder %s52, %s68
      %p70 = scmp.eq.s32.totalorder %s32, 0
      %p71 = por %p69, %p70
      %s73 = sadd.s32 %s72, 1
      %p76 = scmp.eq.s32.totalorder %s26, 3
      %p77 = scmp.ne.s32.totalorder %s72, %s74
      %p78 = scmp.eq.s32.totalorder %s26, 0
      %p79 = por %p77, %p78
      %p80 = scmp.ne.s32.totalorder %s72, %s74
      %p81 = scmp.eq.s32.totalorder %s31, 3
      %p82 = por %p80, %p81
      %p83 = scmp.ne.s32.totalorder %s74, %s75
      %p84 = scmp.eq.s32.totalorder %s31, 0
      %p85 = por %p83, %p84
      %p86 = scmp.ne.s32.totalorder %s74, %s75
      %p87 = scmp.eq.s32.totalorder %s32, 3
      %p88 = por %p86, %p87
      %p90 = scmp.ne.s32.totalorder %s75, %s89
      %p91 = scmp.eq.s32.totalorder %s32, 0
      %p92 = por %p90, %p91
      %s94 = sadd.s32 %s93, 1
      %p97 = scmp.eq.s32.totalorder %s26, 3
      %p98 = scmp.ne.s32.totalorder %s93, %s95
      %p99 = scmp.eq.s32.totalorder %s26, 0
      %p100 = por %p98, %p99
      %p101 = scmp.ne.s32.totalorder %s93, %s95
      %p102 = scmp.eq.s32.totalorder %s31, 3
      %p103 = por %p101, %p102
      %p104 = scmp.ne.s32.totalorder %s95, %s96
      %p105 = scmp.eq.s32.totalorder %s31, 0
      %p106 = por %p104, %p105
      %p107 = scmp.ne.s32.totalorder %s95, %s96
      %p108 = scmp.eq.s32.totalorder %s32, 3
      %p109 = por %p107, %p108
      %p111 = scmp.ne.s32.totalorder %s96, %s110
      %p112 = scmp.eq.s32.totalorder %s32, 0
      %p113 = por %p111, %p112
      %s115 = sadd.s32 %s114, 1
      %p118 = scmp.eq.s32.totalorder %s26, 3
      %p119 = scmp.ne.s32.totalorder %s114, %s116
      %p120 = scmp.eq.s32.totalorder %s26, 0
      %p121 = por %p119, %p120
      %p122 = scmp.ne.s32.totalorder %s114, %s116
      %p123 = scmp.eq.s32.totalorder %s31, 3
      %p124 = por %p122, %p123
      %p125 = scmp.ne.s32.totalorder %s116, %s117
      %p126 = scmp.eq.s32.totalorder %s31, 0
      %p127 = por %p125, %p126
      %p128 = scmp.ne.s32.totalorder %s116, %s117
      %p129 = scmp.eq.s32.totalorder %s32, 3
      %p130 = por %p128, %p129
      %p132 = scmp.ne.s32.totalorder %s117, %s131
      %p133 = scmp.eq.s32.totalorder %s32, 0
      %p134 = por %p132, %p133
      %s136 = sadd.s32 %s135, 1
      %p139 = scmp.eq.s32.totalorder %s26, 3
      %p140 = scmp.ne.s32.totalorder %s135, %s137
      %p141 = scmp.eq.s32.totalorder %s26, 0
      %p142 = por %p140, %p141
      %p143 = scmp.ne.s32.totalorder %s135, %s137
      %p144 = scmp.eq.s32.totalorder %s31, 3
      %p145 = por %p143, %p144
      %p146 = scmp.ne.s32.totalorder %s137, %s138
      %p147 = scmp.eq.s32.totalorder %s31, 0
      %p148 = por %p146, %p147
      %p149 = scmp.ne.s32.totalorder %s137, %s138
      %p150 = scmp.eq.s32.totalorder %s32, 3
      %p151 = por %p149, %p150
      %p153 = scmp.ne.s32.totalorder %s138, %s152
      %p154 = scmp.eq.s32.totalorder %s32, 0
      %p155 = por %p153, %p154
      %s157 = sadd.s32 %s156, 1
      %p160 = scmp.eq.s32.totalorder %s26, 3
      %p161 = scmp.ne.s32.totalorder %s156, %s158
      %p162 = scmp.eq.s32.totalorder %s26, 0
      %p163 = por %p161, %p162
      %p164 = scmp.ne.s32.totalorder %s156, %s158
      %p165 = scmp.eq.s32.totalorder %s31, 3
      %p166 = por %p164, %p165
      %p167 = scmp.ne.s32.totalorder %s158, %s159
      %p168 = scmp.eq.s32.totalorder %s31, 0
      %p169 = por %p167, %p168
      %p170 = scmp.ne.s32.totalorder %s158, %s159
      %p171 = scmp.eq.s32.totalorder %s32, 3
      %p172 = por %p170, %p171
      %p174 = scmp.ne.s32.totalorder %s159, %s173
      %p175 = scmp.eq.s32.totalorder %s32, 0
      %p176 = por %p174, %p175
      %s178 = sadd.s32 %s177, 1
      %p181 = scmp.eq.s32.totalorder %s26, 3
      %p182 = scmp.ne.s32.totalorder %s177, %s179
      %p183 = scmp.eq.s32.totalorder %s26, 0
      %p184 = por %p182, %p183
      %p185 = scmp.ne.s32.totalorder %s177, %s179
      %p186 = scmp.eq.s32.totalorder %s31, 3
      %p187 = por %p185, %p186
      %p188 = scmp.ne.s32.totalorder %s179, %s180
      %p189 = scmp.eq.s32.totalorder %s31, 0
      %p190 = por %p188, %p189
      %p191 = scmp.ne.s32.totalorder %s179, %s180
      %p192 = scmp.eq.s32.totalorder %s32, 3
      %p193 = por %p191, %p192
      %p195 = scmp.ne.s32.totalorder %s180, %s194
      %p196 = scmp.eq.s32.totalorder %s32, 0
      %p197 = por %p195, %p196
      %s199 = sadd.s32 %s198, 1
      %p202 = scmp.eq.s32.totalorder %s26, 3
      %p203 = scmp.ne.s32.totalorder %s198, %s200
      %p204 = scmp.eq.s32.totalorder %s26, 0
      %p205 = por %p203, %p204
      %p206 = scmp.ne.s32.totalorder %s198, %s200
      %p207 = scmp.eq.s32.totalorder %s31, 3
      %p208 = por %p206, %p207
      %p209 = scmp.ne.s32.totalorder %s200, %s201
      %p210 = scmp.eq.s32.totalorder %s31, 0
      %p211 = por %p209, %p210
      %p212 = scmp.ne.s32.totalorder %s200, %s201
      %p213 = scmp.eq.s32.totalorder %s32, 3
      %p214 = por %p212, %p213
      %p216 = scmp.ne.s32.totalorder %s201, %s215
      %p217 = scmp.eq.s32.totalorder %s32, 0
      %p218 = por %p216, %p217
      %s220 = sadd.s32 %s219, 1
      %p223 = scmp.eq.s32.totalorder %s26, 3
      %p224 = scmp.ne.s32.totalorder %s219, %s221
      %p225 = scmp.eq.s32.totalorder %s26, 0
      %p226 = por %p224, %p225
      %p227 = scmp.ne.s32.totalorder %s219, %s221
      %p228 = scmp.eq.s32.totalorder %s31, 3
      %p229 = por %p227, %p228
      %p230 = scmp.ne.s32.totalorder %s221, %s222
      %p231 = scmp.eq.s32.totalorder %s31, 0
      %p232 = por %p230, %p231
      %p233 = scmp.ne.s32.totalorder %s221, %s222
      %p234 = scmp.eq.s32.totalorder %s32, 3
      %p235 = por %p233, %p234
      %p237 = scmp.ne.s32.totalorder %s222, %s236
      %p238 = scmp.eq.s32.totalorder %s32, 0
      %p239 = por %p237, %p238
      %s241 = sadd.s32 %s240, 1
      %p244 = scmp.eq.s32.totalorder %s26, 3
      %p245 = scmp.ne.s32.totalorder %s240, %s242
      %p246 = scmp.eq.s32.totalorder %s26, 0
      %p247 = por %p245, %p246
      %p248 = scmp.ne.s32.totalorder %s240, %s242
      %p249 = scmp.eq.s32.totalorder %s31, 3
      %p250 = por %p248, %p249
      %p251 = scmp.ne.s32.totalorder %s242, %s243
      %p252 = scmp.eq.s32.totalorder %s31, 0
      %p253 = por %p251, %p252
      %p254 = scmp.ne.s32.totalorder %s242, %s243
      %p255 = scmp.eq.s32.totalorder %s32, 3
      %p256 = por %p254, %p255
      %p258 = scmp.ne.s32.totalorder %s243, %s257
      %p259 = scmp.eq.s32.totalorder %s32, 0
      %p260 = por %p258, %p259
      %s262 = sadd.s32 %s261, 1
      %p265 = scmp.eq.s32.totalorder %s26, 3
      %p266 = scmp.ne.s32.totalorder %s261, %s263
      %p267 = scmp.eq.s32.totalorder %s26, 0
      %p268 = por %p266, %p267
      %p269 = scmp.ne.s32.totalorder %s261, %s263
      %p270 = scmp.eq.s32.totalorder %s31, 3
      %p271 = por %p269, %p270
      %p272 = scmp.ne.s32.totalorder %s263, %s264
      %p273 = scmp.eq.s32.totalorder %s31, 0
      %p274 = por %p272, %p273
      %p275 = scmp.ne.s32.totalorder %s263, %s264
      %p276 = scmp.eq.s32.totalorder %s32, 3
      %p277 = por %p275, %p276
      %p279 = scmp.ne.s32.totalorder %s264, %s278
      %p280 = scmp.eq.s32.totalorder %s32, 0
      %p281 = por %p279, %p280
      %s283 = sadd.s32 %s282, 1
      %p286 = scmp.eq.s32.totalorder %s26, 3
      %p287 = scmp.ne.s32.totalorder %s282, %s284
      %p288 = scmp.eq.s32.totalorder %s26, 0
      %p289 = por %p287, %p288
      %p290 = scmp.ne.s32.totalorder %s282, %s284
      %p291 = scmp.eq.s32.totalorder %s31, 3
      %p292 = por %p290, %p291
      %p293 = scmp.ne.s32.totalorder %s284, %s285
      %p294 = scmp.eq.s32.totalorder %s31, 0
      %p295 = por %p293, %p294
      %p296 = scmp.ne.s32.totalorder %s284, %s285
      %p297 = scmp.eq.s32.totalorder %s32, 3
      %p298 = por %p296, %p297
      %p300 = scmp.ne.s32.totalorder %s285, %s299
      %p301 = scmp.eq.s32.totalorder %s32, 0
      %p302 = por %p300, %p301
      %s304 = sadd.s32 %s303, 1
      %p307 = scmp.eq.s32.totalorder %s26, 3
      %p308 = scmp.ne.s32.totalorder %s303, %s305
      %p309 = scmp.eq.s32.totalorder %s26, 0
      %p310 = por %p308, %p309
      %p311 = scmp.ne.s32.totalorder %s303, %s305
      %p312 = scmp.eq.s32.totalorder %s31, 3
      %p313 = por %p311, %p312
      %p314 = scmp.ne.s32.totalorder %s305, %s306
      %p315 = scmp.eq.s32.totalorder %s31, 0
      %p316 = por %p314, %p315
      %p317 = scmp.ne.s32.totalorder %s305, %s306
      %p318 = scmp.eq.s32.totalorder %s32, 3
      %p319 = por %p317, %p318
      %p321 = scmp.ne.s32.totalorder %s306, %s320
      %p322 = scmp.eq.s32.totalorder %s32, 0
      %p323 = por %p321, %p322
      %s325 = sadd.s32 %s324, 1
      %p328 = scmp.eq.s32.totalorder %s26, 3
      %p329 = scmp.ne.s32.totalorder %s324, %s326
      %p330 = scmp.eq.s32.totalorder %s26, 0
      %p331 = por %p329, %p330
      %p332 = scmp.ne.s32.totalorder %s324, %s326
      %p333 = scmp.eq.s32.totalorder %s31, 3
      %p334 = por %p332, %p333
      %p335 = scmp.ne.s32.totalorder %s326, %s327
      %p336 = scmp.eq.s32.totalorder %s31, 0
      %p337 = por %p335, %p336
      %p338 = scmp.ne.s32.totalorder %s326, %s327
      %p339 = scmp.eq.s32.totalorder %s32, 3
      %p340 = por %p338, %p339
      %p342 = scmp.ne.s32.totalorder %s327, %s341
      %p343 = scmp.eq.s32.totalorder %s32, 0
      %p344 = por %p342, %p343
      %s346 = sadd.s32 %s345, 1
      %p349 = scmp.eq.s32.totalorder %s26, 3
      %p350 = scmp.ne.s32.totalorder %s345, %s347
      %p351 = scmp.eq.s32.totalorder %s26, 0
      %p352 = por %p350, %p351
      %p353 = scmp.ne.s32.totalorder %s345, %s347
      %p354 = scmp.eq.s32.totalorder %s31, 3
      %p355 = por %p353, %p354
      %p356 = scmp.ne.s32.totalorder %s347, %s348
      %p357 = scmp.eq.s32.totalorder %s31, 0
      %p358 = por %p356, %p357
      %p359 = scmp.ne.s32.totalorder %s347, %s348
      %p360 = scmp.eq.s32.totalorder %s32, 3
      %p361 = por %p359, %p360
      %p363 = scmp.ne.s32.totalorder %s348, %s362
      %p364 = scmp.eq.s32.totalorder %s32, 0
      %p365 = por %p363, %p364
      %s367 = sadd.s32 %s366, 1
      %p370 = scmp.eq.s32.totalorder %s26, 3
      %p371 = scmp.ne.s32.totalorder %s366, %s368
      %p372 = scmp.eq.s32.totalorder %s26, 0
      %p373 = por %p371, %p372
      %p374 = scmp.ne.s32.totalorder %s366, %s368
      %p375 = scmp.eq.s32.totalorder %s31, 3
      %p376 = por %p374, %p375
      %p377 = scmp.ne.s32.totalorder %s368, %s369
      %p378 = scmp.eq.s32.totalorder %s31, 0
      %p379 = por %p377, %p378
      %p380 = scmp.ne.s32.totalorder %s368, %s369
      %p381 = scmp.eq.s32.totalorder %s32, 3
      %p382 = por %p380, %p381
      %p384 = scmp.ne.s32.totalorder %s369, %s383
      %p385 = scmp.eq.s32.totalorder %s32, 0
      %p386 = por %p384, %p385
      %s388 = sadd.s32 %s387, 1
      %p391 = scmp.eq.s32.totalorder %s26, 3
      %p392 = scmp.ne.s32.totalorder %s387, %s389
      %p393 = scmp.eq.s32.totalorder %s26, 0
      %p394 = por %p392, %p393
      %p395 = scmp.ne.s32.totalorder %s387, %s389
      %p396 = scmp.eq.s32.totalorder %s31, 3
      %p397 = por %p395, %p396
      %p398 = scmp.ne.s32.totalorder %s389, %s390
      %p399 = scmp.eq.s32.totalorder %s31, 0
      %p400 = por %p398, %p399
      %p401 = scmp.ne.s32.totalorder %s389, %s390
      %p402 = scmp.eq.s32.totalorder %s32, 3
      %p403 = por %p401, %p402
      %p405 = scmp.ne.s32.totalorder %s390, %s404
      %p406 = scmp.eq.s32.totalorder %s32, 0
      %p407 = por %p405, %p406
      %s408 = ssub.s32 %s33, %s45
      %s409 = ssub.s32 %s34, %s41
      %s410 = sor.u32 %s408, %s409
      %p411 = scmp.eq.s32.totalorder %s410, 0
      %s413 = sadd.s32 %s412, 1
      %s414 = scalar_select %p411, %s412, %s413
      %p417 = pneg %p411
      %p418 = scmp.eq.s32.totalorder %s26, 3
      %p419 = por %p417, %p418
      %p420 = scmp.ne.s32.totalorder %s412, %s415
      %p421 = scmp.eq.s32.totalorder %s26, 0
      %p422 = por %p420, %p421
      %p423 = scmp.ne.s32.totalorder %s412, %s415
      %p424 = scmp.eq.s32.totalorder %s31, 3
      %p425 = por %p423, %p424
      %p426 = scmp.ne.s32.totalorder %s415, %s416
      %p427 = scmp.eq.s32.totalorder %s31, 0
      %p428 = por %p426, %p427
      %p429 = scmp.ne.s32.totalorder %s415, %s416
      %p430 = scmp.eq.s32.totalorder %s32, 3
      %p431 = por %p429, %p430
      %p433 = scmp.ne.s32.totalorder %s416, %s432
      %p434 = scmp.eq.s32.totalorder %s32, 0
      %p435 = por %p433, %p434
      %p436 = scmp.le.s32.totalorder 1, %s26
      %p437 = scmp.lt.s32.totalorder %s26, 5
      %p438 = pnand %p436, %p437
      %p439 = pneg %p438
      // Predicated region
      $region9: #{tpu_custom_call.1} parent=5 // pred_check
        _
      $region10: #{tpu_custom_call.1} parent=5 // pred_check_branch
        %441 = sbr.rel (%p438) target = $region12
      $region11: #{tpu_custom_call.1} parent=5 // pred_region
        %s442 = ssub.s32 %s26, 1
        // Predicated region
        $region13: #{tpu_custom_call.1} parent=11 // pred_check
          %p443 = pneg %p85
        $region14: #{tpu_custom_call.1} parent=11 // pred_check_branch
          %445 = sbr.rel (%p443) target = $region16
        $region15: #{tpu_custom_call.1} parent=11 // pred_region
          _
        $region16: #{tpu_custom_call.1} parent=11 // pred_fallthru
          _
        // Predicated region
        $region17: #{tpu_custom_call.1} parent=11 // pred_check
          %p446 = pneg %p106
        $region18: #{tpu_custom_call.1} parent=11 // pred_check_branch
          %448 = sbr.rel (%p446) target = $region20
        $region19: #{tpu_custom_call.1} parent=11 // pred_region
          _
        $region20: #{tpu_custom_call.1} parent=11 // pred_fallthru
          _
        // Predicated region
        $region21: #{tpu_custom_call.1} parent=11 // pred_check
          %p449 = pneg %p127
        $region22: #{tpu_custom_call.1} parent=11 // pred_check_branch
          %451 = sbr.rel (%p449) target = $region24
        $region23: #{tpu_custom_call.1} parent=11 // pred_region
          _
        $region24: #{tpu_custom_call.1} parent=11 // pred_fallthru
          _
        // Predicated region
        $region25: #{tpu_custom_call.1} parent=11 // pred_check
          %p452 = pneg %p148
        $region26: #{tpu_custom_call.1} parent=11 // pred_check_branch
          %454 = sbr.rel (%p452) target = $region28
        $region27: #{tpu_custom_call.1} parent=11 // pred_region
          _
        $region28: #{tpu_custom_call.1} parent=11 // pred_fallthru
          _
        // Predicated region
        $region29: #{tpu_custom_call.1} parent=11 // pred_check
          %p455 = pneg %p169
        $region30: #{tpu_custom_call.1} parent=11 // pred_check_branch
          %457 = sbr.rel (%p455) target = $region32
        $region31: #{tpu_custom_call.1} parent=11 // pred_region
          _
        $region32: #{tpu_custom_call.1} parent=11 // pred_fallthru
          _
        // Predicated region
        $region33: #{tpu_custom_call.1} parent=11 // pred_check
          %p458 = pneg %p190
        $region34: #{tpu_custom_call.1} parent=11 // pred_check_branch
          %460 = sbr.rel (%p458) target = $region36
        $region35: #{tpu_custom_call.1} parent=11 // pred_region
          _
        $region36: #{tpu_custom_call.1} parent=11 // pred_fallthru
          _
        // Predicated region
        $region37: #{tpu_custom_call.1} parent=11 // pred_check
          %p461 = pneg %p211
        $region38: #{tpu_custom_call.1} parent=11 // pred_check_branch
          %463 = sbr.rel (%p461) target = $region40
        $region39: #{tpu_custom_call.1} parent=11 // pred_region
          _
        $region40: #{tpu_custom_call.1} parent=11 // pred_fallthru
          _
        // Predicated region
        $region41: #{tpu_custom_call.1} parent=11 // pred_check
          %p464 = pneg %p232
        $region42: #{tpu_custom_call.1} parent=11 // pred_check_branch
          %466 = sbr.rel (%p464) target = $region44
        $region43: #{tpu_custom_call.1} parent=11 // pred_region
          _
        $region44: #{tpu_custom_call.1} parent=11 // pred_fallthru
          _
        // Predicated region
        $region45: #{tpu_custom_call.1} parent=11 // pred_check
          %p467 = pneg %p253
        $region46: #{tpu_custom_call.1} parent=11 // pred_check_branch
          %469 = sbr.rel (%p467) target = $region48
        $region47: #{tpu_custom_call.1} parent=11 // pred_region
          _
        $region48: #{tpu_custom_call.1} parent=11 // pred_fallthru
          _
        // Predicated region
        $region49: #{tpu_custom_call.1} parent=11 // pred_check
          %p470 = pneg %p274
        $region50: #{tpu_custom_call.1} parent=11 // pred_check_branch
          %472 = sbr.rel (%p470) target = $region52
        $region51: #{tpu_custom_call.1} parent=11 // pred_region
          _
        $region52: #{tpu_custom_call.1} parent=11 // pred_fallthru
          _
        // Predicated region
        $region53: #{tpu_custom_call.1} parent=11 // pred_check
          %p473 = pneg %p295
        $region54: #{tpu_custom_call.1} parent=11 // pred_check_branch
          %475 = sbr.rel (%p473) target = $region56
        $region55: #{tpu_custom_call.1} parent=11 // pred_region
          _
        $region56: #{tpu_custom_call.1} parent=11 // pred_fallthru
          _
        // Predicated region
        $region57: #{tpu_custom_call.1} parent=11 // pred_check
          %p476 = pneg %p316
        $region58: #{tpu_custom_call.1} parent=11 // pred_check_branch
          %478 = sbr.rel (%p476) target = $region60
        $region59: #{tpu_custom_call.1} parent=11 // pred_region
          _
        $region60: #{tpu_custom_call.1} parent=11 // pred_fallthru
          _
        // Predicated region
        $region61: #{tpu_custom_call.1} parent=11 // pred_check
          %p479 = pneg %p337
        $region62: #{tpu_custom_call.1} parent=11 // pred_check_branch
          %481 = sbr.rel (%p479) target = $region64
        $region63: #{tpu_custom_call.1} parent=11 // pred_region
          _
        $region64: #{tpu_custom_call.1} parent=11 // pred_fallthru
          _
        // Predicated region
        $region65: #{tpu_custom_call.1} parent=11 // pred_check
          %p482 = pneg %p358
        $region66: #{tpu_custom_call.1} parent=11 // pred_check_branch
          %484 = sbr.rel (%p482) target = $region68
        $region67: #{tpu_custom_call.1} parent=11 // pred_region
          _
        $region68: #{tpu_custom_call.1} parent=11 // pred_fallthru
          _
        // Predicated region
        $region69: #{tpu_custom_call.1} parent=11 // pred_check
          %p485 = pneg %p379
        $region70: #{tpu_custom_call.1} parent=11 // pred_check_branch
          %487 = sbr.rel (%p485) target = $region72
        $region71: #{tpu_custom_call.1} parent=11 // pred_region
          _
        $region72: #{tpu_custom_call.1} parent=11 // pred_fallthru
          _
        // Predicated region
        $region73: #{tpu_custom_call.1} parent=11 // pred_check
          %p488 = pneg %p400
        $region74: #{tpu_custom_call.1} parent=11 // pred_check_branch
          %490 = sbr.rel (%p488) target = $region76
        $region75: #{tpu_custom_call.1} parent=11 // pred_region
          _
        $region76: #{tpu_custom_call.1} parent=11 // pred_fallthru
          _
      $region12: #{tpu_custom_call.1} parent=5 // pred_fallthru
        _
      %p491 = scmp.lt.s32.totalorder %s26, 4
      // Predicated region
      $region77: #{tpu_custom_call.1} parent=5 // pred_check
        %p492 = pneg %p491
      $region78: #{tpu_custom_call.1} parent=5 // pred_check_branch
        %494 = sbr.rel (%p492) target = $region80
      $region79: #{tpu_custom_call.1} parent=5 // pred_region
        // Predicated region
        $region81: #{tpu_custom_call.1} parent=79 // pred_check
          %p495 = pneg %p58
        $region82: #{tpu_custom_call.1} parent=79 // pred_check_branch
          %497 = sbr.rel (%p495) target = $region84
        $region83: #{tpu_custom_call.1} parent=79 // pred_region
          %p498 = scmp.lt.s32.totalorder %s33, 1
          %s499 = scalar_select %p498, %s33, 1
          %s500 = smul.addr %s499, 2
          %s501 = smul.addr %s500, 8
          %s502 = scalar_lea.vmem %s0, %s501
        $region84: #{tpu_custom_call.1} parent=79 // pred_fallthru
          _
      $region80: #{tpu_custom_call.1} parent=5 // pred_fallthru
        _
      %p503 = scmp.le.s32.totalorder 1, %s26
      %p504 = scmp.lt.s32.totalorder %s26, 5
      %p505 = pnand %p503, %p504
      %p506 = pneg %p505
      // Predicated region
      $region85: #{tpu_custom_call.1} parent=5 // pred_check
        _
      $region86: #{tpu_custom_call.1} parent=5 // pred_check_branch
        %508 = sbr.rel (%p505) target = $region88
      $region87: #{tpu_custom_call.1} parent=5 // pred_region
        %s509 = ssub.s32 %s26, 1
        %p510 = scmp.lt.s32.totalorder %s35, 1
        %s511 = scalar_select %p510, %s35, 1
        %s512 = smul.addr %s511, 2
        %s513 = smul.addr %s512, 8
        %s514 = scalar_lea.vmem %s0, %s513
        %p515 = pneg %p64
        %p516 = pneg %p61
        %p517 = pneg %p85
        %p518 = pneg %p82
        %p519 = pneg %p106
        %p520 = pneg %p103
        %p521 = pneg %p127
        %p522 = pneg %p124
        %p523 = pneg %p148
        %p524 = pneg %p145
        %p525 = pneg %p169
        %p526 = pneg %p166
        %p527 = pneg %p190
        %p528 = pneg %p187
        %p529 = pneg %p211
        %p530 = pneg %p208
        %p531 = pneg %p232
        %p532 = pneg %p229
        %p533 = pneg %p253
        %p534 = pneg %p250
        %p535 = pneg %p274
        %p536 = pneg %p271
        %p537 = pneg %p295
        %p538 = pneg %p292
        %p539 = pneg %p316
        %p540 = pneg %p313
        %p541 = pneg %p337
        %p542 = pneg %p334
        %p543 = pneg %p358
        %p544 = pneg %p355
        %p545 = pneg %p379
        %p546 = pneg %p376
        %p547 = pneg %p400
        %p548 = pneg %p397
        %p549 = pneg %p428
        %p550 = pneg %p425
        %s551 = sand.u32 %s415, 1
        %s552 = scalar_lea.sflag [#allocation5], %s551
        %s553 = sand.u32 %s415, 1
        %s554 = smul.addr %s553, 8
        %s555 = scalar_lea.vmem [#allocation4], %s554
        %p556 = scmp.lt.s32.totalorder %s35, 1
        %s557 = scalar_select %p556, %s35, 1
        %s558 = smul.addr %s557, 2
        %s559 = smul.addr %s558, 8
        %s560 = scalar_lea.vmem %s0, %s559
        %v561 = vld [vmem:[%s1] sm:$0x1]
        %v562 = vld [vmem:[%s2] sm:$0x1]
        %p563 = scmp.eq.s32.totalorder %s36, 0
        // Predicated region
        $region89: #{tpu_custom_call.1} parent=87 // pred_check
          %p564 = pneg %p563
        $region90: #{tpu_custom_call.1} parent=87 // pred_check_branch
          %566 = sbr.rel (%p564) target = $region92
        $region91: #{tpu_custom_call.1} parent=87 // pred_region
          %v567 = vld [vmem:[%s560] sm:$0xff]
          %v568 = vld [vmem:[%s560 + $0x8] sm:$0xff]
          %vm569 = vcmask 261120
          %v570 = vsel %vm569, %v567, 0.0
          %571 = vadd.xlane.f32.xlu0 %v570
          %v572 = vpop.xlane.xlu0 %571
          %v573 = vsel %vm569, %v568, 0.0
          %574 = vadd.xlane.f32.xlu0 %v573
          %v575 = vpop.xlane.xlu0 %574
          %v576 = vrcp.pop 32.0
          %v577 = vmul.f32 32.0, %v576
          %v578 = vsub.f32 1.0, %v577
          %v579 = vmul.f32 %v576, %v578
          %v580 = vadd.f32 %v576, %v579
          %vm581 = vweird.f32 %v576
          %v582 = vsel %vm581, %v576, %v580
          %v583 = vmul.f32 %v572, %v582
          %v584 = vmul.f32 %v575, %v582
          %v585 = vsub.f32 %v567, %v583
          %v586 = vsub.f32 %v568, %v584
          %v587 = vmul.f32 %v585, %v585
          %v588 = vmul.f32 %v586, %v586
          %v589 = vsel %vm569, %v587, 0.0
          %590 = vadd.xlane.f32.xlu0 %v589
          %v591 = vpop.xlane.xlu0 %590
          %v592 = vsel %vm569, %v588, 0.0
          %593 = vadd.xlane.f32.xlu0 %v592
          %v594 = vpop.xlane.xlu0 %593
          %v595 = vmul.f32 %v591, %v582
          %v596 = vmul.f32 %v594, %v582
          %v597 = vadd.f32 %v595, 1e-05
          %v598 = vadd.f32 %v596, 1e-05
          %v599 = vrsqrt.pop %v597
          %v600 = vmul.f32 %v599, %v597
          %v601 = vmul.f32 %v600, %v599
          %v602 = vmul.f32 0.5, %v601
          %v603 = vsub.f32 1.5, %v602
          %v604 = vmul.f32 %v599, %v603
          %vm605 = vweird.f32 %v597
          %vm606 = vweird.f32 %v599
          %vm607 = vmor %vm605, %vm606
          %v608 = vsel %vm607, %v599, %v604
          %v609 = vrsqrt.pop %v598
          %v610 = vmul.f32 %v609, %v598
          %v611 = vmul.f32 %v610, %v609
          %v612 = vmul.f32 0.5, %v611
          %v613 = vsub.f32 1.5, %v612
          %v614 = vmul.f32 %v609, %v613
          %vm615 = vweird.f32 %v598
          %vm616 = vweird.f32 %v609
          %vm617 = vmor %vm615, %vm616
          %v618 = vsel %vm617, %v609, %v614
          %v619 = vmul.f32 %v585, %v608
          %v620 = vmul.f32 %v586, %v618
          %v622 = vperm.slane %v561, 0
          %v624 = vmul.f32 %v619, %v622
          %v625 = vmul.f32 %v620, %v622
          %v627 = vperm.slane %v562, 0
          %v629 = vadd.f32 %v624, %v627
          %v630 = vadd.f32 %v625, %v627
          %v631 = vld [vmem:[%s4] sm:$0xff]
          %v632 = vld [vmem:[%s4 + $0x8] sm:$0xff]
          %v633 = vld [vmem:[%s4 + $0x10] sm:$0xff]
          %v634 = vld [vmem:[%s4 + $0x18] sm:$0xff]
          %v635 = vld [vmem:[%s7] sm:$0x1]
          %v637 = vperm.slane %v635, 0
          %v640 = vsel %vm569, %v629, 0
          %v643 = vsel %vm569, %v630, 0
          %645 = vmatpush.msra.mxu0 0.0
          %646 = vmatpush.msra.mxu0 0.0
          %647 = vmatpush.msra.mxu0 0.0
          %648 = vmatpush.msra.mxu0 0.0
          %649 = vmatpush.msra.mxu0 0.0
          %650 = vmatpush.msra.mxu0 0.0
          %651 = vmatpush.msra.mxu0 0.0
          %652 = vmatpush.msra.mxu0 0.0
          %653 = vmatpush.msra.mxu0 0.0
          %654 = vmatpush.msra.mxu0 0.0
          %655 = vmatpush.msra.mxu0 0.0
          %656 = vmatpush.msra.mxu0 0.0
          %657 = vmatpush.msra.mxu0 %v634
          %658 = vmatpush.msra.mxu0 %v633
          %659 = vmatpush.msra.mxu0 %v632
          %660 = vmatpush.msra.mxu0 %v631
          %661 = vmatmul.f32.gmra.mxu0 %v640
          %v662 = vpop.f32.mrf.mxu0
          %v663 = vadd.f32 %v637, %v662
          %664 = vmatmul.f32.gmra.mxu0 %v643
          %v665 = vpop.f32.mrf.mxu0
          %v666 = vadd.f32 %v637, %v665
          %667 = vdwg.mxu0
          %v668 = vld [vmem:[%s5] sm:$0xff]
          %v669 = vld [vmem:[%s5 + $0x8] sm:$0xff]
          %v670 = vld [vmem:[%s5 + $0x10] sm:$0xff]
          %v671 = vld [vmem:[%s5 + $0x18] sm:$0xff]
          %v672 = vld [vmem:[%s8] sm:$0x1]
          %v674 = vperm.slane %v672, 0
          %676 = vmatpush.msra.mxu0 0.0
          %677 = vmatpush.msra.mxu0 0.0
          %678 = vmatpush.msra.mxu0 0.0
          %679 = vmatpush.msra.mxu0 0.0
          %680 = vmatpush.msra.mxu0 0.0
          %681 = vmatpush.msra.mxu0 0.0
          %682 = vmatpush.msra.mxu0 0.0
          %683 = vmatpush.msra.mxu0 0.0
          %684 = vmatpush.msra.mxu0 0.0
          %685 = vmatpush.msra.mxu0 0.0
          %686 = vmatpush.msra.mxu0 0.0
          %687 = vmatpush.msra.mxu0 0.0
          %688 = vmatpush.msra.mxu0 %v671
          %689 = vmatpush.msra.mxu0 %v670
          %690 = vmatpush.msra.mxu0 %v669
          %691 = vmatpush.msra.mxu0 %v668
          %692 = vmatmul.f32.gmra.mxu0 %v640
          %v693 = vpop.f32.mrf.mxu0
          %v694 = vadd.f32 %v674, %v693
          %695 = vmatmul.f32.gmra.mxu0 %v643
          %v696 = vpop.f32.mrf.mxu0
          %v697 = vadd.f32 %v674, %v696
          %698 = vdwg.mxu0
          %vm699 = vcmask 64512
          %700 = vst.msk [vmem:[#allocation2] sm:$0xff] %vm699, %v663
          %701 = vst.msk [vmem:[#allocation2 + $0x8] sm:$0xff] %vm699, %v666
          %702 = vst.msk [vmem:[#allocation3] sm:$0xff] %vm699, %v694
          %703 = vst.msk [vmem:[#allocation3 + $0x8] sm:$0xff] %vm699, %v697
          %706 = vrot.lane.b32.xlu0 %v663, 120
          %v707 = vpop.permute.xlu0 %706
          %708 = vrot.lane.b32.xlu0 %v666, 120
          %v709 = vpop.permute.xlu0 %708
          %s712 = scalar_lea.vmem [#allocation2], 16
          %713 = vst.msk [vmem:[%s712] sm:$0xff] %vm699, %v707
          %714 = vst.msk [vmem:[%s712 + $0x8] sm:$0xff] %vm699, %v709
          %717 = vrot.lane.b32.xlu0 %v694, 120
          %v718 = vpop.permute.xlu0 %717
          %719 = vrot.lane.b32.xlu0 %v697, 120
          %v720 = vpop.permute.xlu0 %719
          %s723 = scalar_lea.vmem [#allocation3], 16
          %724 = vst.msk [vmem:[%s723] sm:$0xff] %vm699, %v718
          %725 = vst.msk [vmem:[%s723 + $0x8] sm:$0xff] %vm699, %v720
          %726 = vrot.lane.b32.xlu0 %v663, 112
          %v727 = vpop.permute.xlu0 %726
          %728 = vrot.lane.b32.xlu0 %v666, 112
          %v729 = vpop.permute.xlu0 %728
          %s732 = scalar_lea.vmem [#allocation2], 32
          %733 = vst.msk [vmem:[%s732] sm:$0xff] %vm699, %v727
          %734 = vst.msk [vmem:[%s732 + $0x8] sm:$0xff] %vm699, %v729
          %735 = vrot.lane.b32.xlu0 %v694, 112
          %v736 = vpop.permute.xlu0 %735
          %737 = vrot.lane.b32.xlu0 %v697, 112
          %v738 = vpop.permute.xlu0 %737
          %s741 = scalar_lea.vmem [#allocation3], 32
          %742 = vst.msk [vmem:[%s741] sm:$0xff] %vm699, %v736
          %743 = vst.msk [vmem:[%s741 + $0x8] sm:$0xff] %vm699, %v738
          %744 = vrot.lane.b32.xlu0 %v663, 104
          %v745 = vpop.permute.xlu0 %744
          %746 = vrot.lane.b32.xlu0 %v666, 104
          %v747 = vpop.permute.xlu0 %746
          %s750 = scalar_lea.vmem [#allocation2], 48
          %751 = vst.msk [vmem:[%s750] sm:$0xff] %vm699, %v745
          %752 = vst.msk [vmem:[%s750 + $0x8] sm:$0xff] %vm699, %v747
          %753 = vrot.lane.b32.xlu0 %v694, 104
          %v754 = vpop.permute.xlu0 %753
          %755 = vrot.lane.b32.xlu0 %v697, 104
          %v756 = vpop.permute.xlu0 %755
          %s759 = scalar_lea.vmem [#allocation3], 48
          %760 = vst.msk [vmem:[%s759] sm:$0xff] %vm699, %v754
          %761 = vst.msk [vmem:[%s759 + $0x8] sm:$0xff] %vm699, %v756
        $region92: #{tpu_custom_call.1} parent=87 // pred_fallthru
          _
        %s762 = smul.u32 %s36, 8
        %s763 = scalar_lea.vmem %s560, %s762
        %v764 = vld [vmem:[%s763] sm:$0xff]
        %vm765 = vcmask 261120
        %v766 = vsel %vm765, %v764, 0.0
        %767 = vadd.xlane.f32.xlu0 %v766
        %v768 = vpop.xlane.xlu0 %767
        %v769 = vrcp.pop 32.0
        %v770 = vmul.f32 32.0, %v769
        %v771 = vsub.f32 1.0, %v770
        %v772 = vmul.f32 %v769, %v771
        %v773 = vadd.f32 %v769, %v772
        %vm774 = vweird.f32 %v769
        %v775 = vsel %vm774, %v769, %v773
        %v776 = vmul.f32 %v768, %v775
        %v777 = vsub.f32 %v764, %v776
        %v778 = vmul.f32 %v777, %v777
        %v779 = vsel %vm765, %v778, 0.0
        %780 = vadd.xlane.f32.xlu0 %v779
        %v781 = vpop.xlane.xlu0 %780
        %v782 = vmul.f32 %v781, %v775
        %v783 = vadd.f32 %v782, 1e-05
        %v784 = vrsqrt.pop %v783
        %v785 = vmul.f32 %v784, %v783
        %v786 = vmul.f32 %v785, %v784
        %v787 = vmul.f32 0.5, %v786
        %v788 = vsub.f32 1.5, %v787
        %v789 = vmul.f32 %v784, %v788
        %vm790 = vweird.f32 %v783
        %vm791 = vweird.f32 %v784
        %vm792 = vmor %vm790, %vm791
        %v793 = vsel %vm792, %v784, %v789
        %v794 = vmul.f32 %v777, %v793
        %v796 = vperm.slane %v561, 0
        %v798 = vmul.f32 %v794, %v796
        %v800 = vperm.slane %v562, 0
        %v802 = vadd.f32 %v798, %v800
        %v803 = vld [vmem:[%s3] sm:$0xff]
        %v804 = vld [vmem:[%s3 + $0x8] sm:$0xff]
        %v805 = vld [vmem:[%s3 + $0x10] sm:$0xff]
        %v806 = vld [vmem:[%s3 + $0x18] sm:$0xff]
        %v807 = vld [vmem:[%s3 + $0x20] sm:$0xff]
        %v808 = vld [vmem:[%s3 + $0x28] sm:$0xff]
        %v809 = vld [vmem:[%s3 + $0x30] sm:$0xff]
        %v810 = vld [vmem:[%s3 + $0x38] sm:$0xff]
        %v811 = vld [vmem:[%s3 + $0x40] sm:$0xff]
        %v812 = vld [vmem:[%s3 + $0x48] sm:$0xff]
        %v813 = vld [vmem:[%s3 + $0x50] sm:$0xff]
        %v814 = vld [vmem:[%s3 + $0x58] sm:$0xff]
        %v815 = vld [vmem:[%s3 + $0x60] sm:$0xff]
        %v816 = vld [vmem:[%s3 + $0x68] sm:$0xff]
        %v817 = vld [vmem:[%s3 + $0x70] sm:$0xff]
        %v818 = vld [vmem:[%s3 + $0x78] sm:$0xff]
        %v819 = vld [vmem:[%s6] sm:$0x1]
        %v820 = vld [vmem:[%s6 + $0x1] sm:$0x1]
        %v821 = vld [vmem:[%s6 + $0x2] sm:$0x1]
        %v822 = vld [vmem:[%s6 + $0x3] sm:$0x1]
        %v827 = vperm.slane %v819, 0
        %v828 = vperm.slane %v820, 0
        %v829 = vperm.slane %v821, 0
        %v830 = vperm.slane %v822, 0
        %v836 = vsel %vm765, %v802, 0
        %838 = vmatpush.msra.mxu0 0.0
        %839 = vmatpush.msra.mxu0 0.0
        %840 = vmatpush.msra.mxu0 0.0
        %841 = vmatpush.msra.mxu0 0.0
        %842 = vmatpush.msra.mxu0 0.0
        %843 = vmatpush.msra.mxu0 0.0
        %844 = vmatpush.msra.mxu0 0.0
        %845 = vmatpush.msra.mxu0 0.0
        %846 = vmatpush.msra.mxu0 0.0
        %847 = vmatpush.msra.mxu0 0.0
        %848 = vmatpush.msra.mxu0 0.0
        %849 = vmatpush.msra.mxu0 0.0
        %850 = vmatpush.msra.mxu0 %v806
        %851 = vmatpush.msra.mxu0 %v805
        %852 = vmatpush.msra.mxu0 %v804
        %853 = vmatpush.msra.mxu0 %v803
        %854 = vmatmul.f32.gmra.mxu0 %v836
        %v855 = vpop.f32.mrf.mxu0
        %v856 = vadd.f32 %v827, %v855
        %857 = vdwg.mxu0
        %858 = vmatpush.msra.mxu0 0.0
        %859 = vmatpush.msra.mxu0 0.0
        %860 = vmatpush.msra.mxu0 0.0
        %861 = vmatpush.msra.mxu0 0.0
        %862 = vmatpush.msra.mxu0 0.0
        %863 = vmatpush.msra.mxu0 0.0
        %864 = vmatpush.msra.mxu0 0.0
        %865 = vmatpush.msra.mxu0 0.0
        %866 = vmatpush.msra.mxu0 0.0
        %867 = vmatpush.msra.mxu0 0.0
        %868 = vmatpush.msra.mxu0 0.0
        %869 = vmatpush.msra.mxu0 0.0
        %870 = vmatpush.msra.mxu0 %v810
        %871 = vmatpush.msra.mxu0 %v809
        %872 = vmatpush.msra.mxu0 %v808
        %873 = vmatpush.msra.mxu0 %v807
        %874 = vmatmul.f32.gmra.mxu0 %v836
        %v875 = vpop.f32.mrf.mxu0
        %v876 = vadd.f32 %v828, %v875
        %877 = vdwg.mxu0
        %878 = vmatpush.msra.mxu0 0.0
        %879 = vmatpush.msra.mxu0 0.0
        %880 = vmatpush.msra.mxu0 0.0
        %881 = vmatpush.msra.mxu0 0.0
        %882 = vmatpush.msra.mxu0 0.0
        %883 = vmatpush.msra.mxu0 0.0
        %884 = vmatpush.msra.mxu0 0.0
        %885 = vmatpush.msra.mxu0 0.0
        %886 = vmatpush.msra.mxu0 0.0
        %887 = vmatpush.msra.mxu0 0.0
        %888 = vmatpush.msra.mxu0 0.0
        %889 = vmatpush.msra.mxu0 0.0
        %890 = vmatpush.msra.mxu0 %v814
        %891 = vmatpush.msra.mxu0 %v813
        %892 = vmatpush.msra.mxu0 %v812
        %893 = vmatpush.msra.mxu0 %v811
        %894 = vmatmul.f32.gmra.mxu0 %v836
        %v895 = vpop.f32.mrf.mxu0
        %v896 = vadd.f32 %v829, %v895
        %897 = vdwg.mxu0
        %898 = vmatpush.msra.mxu0 0.0
        %899 = vmatpush.msra.mxu0 0.0
        %900 = vmatpush.msra.mxu0 0.0
        %901 = vmatpush.msra.mxu0 0.0
        %902 = vmatpush.msra.mxu0 0.0
        %903 = vmatpush.msra.mxu0 0.0
        %904 = vmatpush.msra.mxu0 0.0
        %905 = vmatpush.msra.mxu0 0.0
        %906 = vmatpush.msra.mxu0 0.0
        %907 = vmatpush.msra.mxu0 0.0
        %908 = vmatpush.msra.mxu0 0.0
        %909 = vmatpush.msra.mxu0 0.0
        %910 = vmatpush.msra.mxu0 %v818
        %911 = vmatpush.msra.mxu0 %v817
        %912 = vmatpush.msra.mxu0 %v816
        %913 = vmatpush.msra.mxu0 %v815
        %914 = vmatmul.f32.gmra.mxu0 %v836
        %v915 = vpop.f32.mrf.mxu0
        %v916 = vadd.f32 %v830, %v915
        %917 = vdwg.mxu0
        %v918 = vmul.f32 %v856, 0.35355338
        %v919 = vmul.f32 %v876, 0.35355338
        %v920 = vmul.f32 %v896, 0.35355338
        %v921 = vmul.f32 %v916, 0.35355338
        %v922 = vld [vmem:[#allocation2] sm:$0xff]
        %v923 = vld [vmem:[#allocation2 + $0x8] sm:$0xff]
        %v924 = vld [vmem:[#allocation2 + $0x10] sm:$0xff]
        %v925 = vld [vmem:[#allocation2 + $0x18] sm:$0xff]
        %v926 = vld [vmem:[#allocation2 + $0x20] sm:$0xff]
        %v927 = vld [vmem:[#allocation2 + $0x28] sm:$0xff]
        %v928 = vld [vmem:[#allocation2 + $0x30] sm:$0xff]
        %v929 = vld [vmem:[#allocation2 + $0x38] sm:$0xff]
        %vm930 = vcmask 64512
        %v932 = vsel %vm930, %v918, 0
        %v935 = vsel %vm930, %v922, 0
        %v938 = vsel %vm930, %v923, 0
        %940 = vmatpush.xpose.msra.mxu0 0.0
        %941 = vmatpush.xpose.msra.mxu0 0.0
        %942 = vmatpush.xpose.msra.mxu0 0.0
        %943 = vmatpush.xpose.msra.mxu0 0.0
        %944 = vmatpush.xpose.msra.mxu0 0.0
        %945 = vmatpush.xpose.msra.mxu0 0.0
        %946 = vmatpush.xpose.msra.mxu0 0.0
        %947 = vmatpush.xpose.msra.mxu0 0.0
        %948 = vmatpush.xpose.msra.mxu0 0.0
        %949 = vmatpush.xpose.msra.mxu0 0.0
        %950 = vmatpush.xpose.msra.mxu0 0.0
        %951 = vmatpush.xpose.msra.mxu0 0.0
        %952 = vmatpush.xpose.msra.mxu0 0.0
        %953 = vmatpush.xpose.msra.mxu0 0.0
        %954 = vmatpush.xpose.msra.mxu0 %v938
        %955 = vmatpush.xpose.msra.mxu0 %v935
        %956 = vmatmul.f32.gmra.mxu0 %v932
        %v957 = vpop.f32.mrf.mxu0
        %v958 = vadd.f32 0.0, %v957
        %959 = vdwg.mxu0
        %v961 = vsel %vm930, %v919, 0
        %v964 = vsel %vm930, %v924, 0
        %v967 = vsel %vm930, %v925, 0
        %969 = vmatpush.xpose.msra.mxu0 0.0
        %970 = vmatpush.xpose.msra.mxu0 0.0
        %971 = vmatpush.xpose.msra.mxu0 0.0
        %972 = vmatpush.xpose.msra.mxu0 0.0
        %973 = vmatpush.xpose.msra.mxu0 0.0
        %974 = vmatpush.xpose.msra.mxu0 0.0
        %975 = vmatpush.xpose.msra.mxu0 0.0
        %976 = vmatpush.xpose.msra.mxu0 0.0
        %977 = vmatpush.xpose.msra.mxu0 0.0
        %978 = vmatpush.xpose.msra.mxu0 0.0
        %979 = vmatpush.xpose.msra.mxu0 0.0
        %980 = vmatpush.xpose.msra.mxu0 0.0
        %981 = vmatpush.xpose.msra.mxu0 0.0
        %982 = vmatpush.xpose.msra.mxu0 0.0
        %983 = vmatpush.xpose.msra.mxu0 %v967
        %984 = vmatpush.xpose.msra.mxu0 %v964
        %985 = vmatmul.f32.gmra.mxu0 %v961
        %v986 = vpop.f32.mrf.mxu0
        %v987 = vadd.f32 0.0, %v986
        %988 = vdwg.mxu0
        %v990 = vsel %vm930, %v920, 0
        %v993 = vsel %vm930, %v926, 0
        %v996 = vsel %vm930, %v927, 0
        %998 = vmatpush.xpose.msra.mxu0 0.0
        %999 = vmatpush.xpose.msra.mxu0 0.0
        %1000 = vmatpush.xpose.msra.mxu0 0.0
        %1001 = vmatpush.xpose.msra.mxu0 0.0
        %1002 = vmatpush.xpose.msra.mxu0 0.0
        %1003 = vmatpush.xpose.msra.mxu0 0.0
        %1004 = vmatpush.xpose.msra.mxu0 0.0
        %1005 = vmatpush.xpose.msra.mxu0 0.0
        %1006 = vmatpush.xpose.msra.mxu0 0.0
        %1007 = vmatpush.xpose.msra.mxu0 0.0
        %1008 = vmatpush.xpose.msra.mxu0 0.0
        %1009 = vmatpush.xpose.msra.mxu0 0.0
        %1010 = vmatpush.xpose.msra.mxu0 0.0
        %1011 = vmatpush.xpose.msra.mxu0 0.0
        %1012 = vmatpush.xpose.msra.mxu0 %v996
        %1013 = vmatpush.xpose.msra.mxu0 %v993
        %1014 = vmatmul.f32.gmra.mxu0 %v990
        %v1015 = vpop.f32.mrf.mxu0
        %v1016 = vadd.f32 0.0, %v1015
        %1017 = vdwg.mxu0
        %v1019 = vsel %vm930, %v921, 0
        %v1022 = vsel %vm930, %v928, 0
        %v1025 = vsel %vm930, %v929, 0
        %1027 = vmatpush.xpose.msra.mxu0 0.0
        %1028 = vmatpush.xpose.msra.mxu0 0.0
        %1029 = vmatpush.xpose.msra.mxu0 0.0
        %1030 = vmatpush.xpose.msra.mxu0 0.0
        %1031 = vmatpush.xpose.msra.mxu0 0.0
        %1032 = vmatpush.xpose.msra.mxu0 0.0
        %1033 = vmatpush.xpose.msra.mxu0 0.0
        %1034 = vmatpush.xpose.msra.mxu0 0.0
        %1035 = vmatpush.xpose.msra.mxu0 0.0
        %1036 = vmatpush.xpose.msra.mxu0 0.0
        %1037 = vmatpush.xpose.msra.mxu0 0.0
        %1038 = vmatpush.xpose.msra.mxu0 0.0
        %1039 = vmatpush.xpose.msra.mxu0 0.0
        %1040 = vmatpush.xpose.msra.mxu0 0.0
        %1041 = vmatpush.xpose.msra.mxu0 %v1025
        %1042 = vmatpush.xpose.msra.mxu0 %v1022
        %1043 = vmatmul.f32.gmra.mxu0 %v1019
        %v1044 = vpop.f32.mrf.mxu0
        %v1045 = vadd.f32 0.0, %v1044
        %1046 = vdwg.mxu0
        %vm1047 = vcmask 130048
        %v1048 = vsel %vm1047, %v958, -inf
        %1049 = vmax.xlane.f32.xlu0 %v1048
        %v1050 = vpop.xlane.xlu0 %1049
        %v1051 = vsel %vm1047, %v987, -inf
        %1052 = vmax.xlane.f32.xlu0 %v1051
        %v1053 = vpop.xlane.xlu0 %1052
        %v1054 = vsel %vm1047, %v1016, -inf
        %1055 = vmax.xlane.f32.xlu0 %v1054
        %v1056 = vpop.xlane.xlu0 %1055
        %v1057 = vsel %vm1047, %v1045, -inf
        %1058 = vmax.xlane.f32.xlu0 %v1057
        %v1059 = vpop.xlane.xlu0 %1058
        %v1060 = vsub.f32 %v958, %v1050
        %v1061 = vsub.f32 %v987, %v1053
        %v1062 = vsub.f32 %v1016, %v1056
        %v1063 = vsub.f32 %v1045, %v1059
        %v1064 = vmul.f32 %v1060, 1.442695
        %v1065 = vpow.pop %v1064
        %v1066 = vmul.f32 %v1061, 1.442695
        %v1067 = vpow.pop %v1066
        %v1068 = vmul.f32 %v1062, 1.442695
        %v1069 = vpow.pop %v1068
        %v1070 = vmul.f32 %v1063, 1.442695
        %v1071 = vpow.pop %v1070
        %v1072 = vsel %vm1047, %v1065, 0.0
        %1073 = vadd.xlane.f32.xlu0 %v1072
        %v1074 = vpop.xlane.xlu0 %1073
        %v1075 = vsel %vm1047, %v1067, 0.0
        %1076 = vadd.xlane.f32.xlu0 %v1075
        %v1077 = vpop.xlane.xlu0 %1076
        %v1078 = vsel %vm1047, %v1069, 0.0
        %1079 = vadd.xlane.f32.xlu0 %v1078
        %v1080 = vpop.xlane.xlu0 %1079
        %v1081 = vsel %vm1047, %v1071, 0.0
        %1082 = vadd.xlane.f32.xlu0 %v1081
        %v1083 = vpop.xlane.xlu0 %1082
        %v1084 = vrcp.pop %v1074
        %v1085 = vrcp.pop %v1077
        %v1086 = vrcp.pop %v1080
        %v1087 = vrcp.pop %v1083
        %v1088 = vmul.f32 %v1065, %v1084
        %v1089 = vmul.f32 %v1067, %v1085
        %v1090 = vmul.f32 %v1069, %v1086
        %v1091 = vmul.f32 %v1071, %v1087
        %v1092 = vld [vmem:[#allocation3] sm:$0xff]
        %v1093 = vld [vmem:[#allocation3 + $0x8] sm:$0xff]
        %v1094 = vld [vmem:[#allocation3 + $0x10] sm:$0xff]
        %v1095 = vld [vmem:[#allocation3 + $0x18] sm:$0xff]
        %v1096 = vld [vmem:[#allocation3 + $0x20] sm:$0xff]
        %v1097 = vld [vmem:[#allocation3 + $0x28] sm:$0xff]
        %v1098 = vld [vmem:[#allocation3 + $0x30] sm:$0xff]
        %v1099 = vld [vmem:[#allocation3 + $0x38] sm:$0xff]
        %v1101 = vsel %vm1047, %v1088, 0
        %1103 = vmatpush.msra.mxu0 0.0
        %1104 = vmatpush.msra.mxu0 0.0
        %1105 = vmatpush.msra.mxu0 0.0
        %1106 = vmatpush.msra.mxu0 0.0
        %1107 = vmatpush.msra.mxu0 0.0
        %1108 = vmatpush.msra.mxu0 0.0
        %1109 = vmatpush.msra.mxu0 0.0
        %1110 = vmatpush.msra.mxu0 0.0
        %1111 = vmatpush.msra.mxu0 0.0
        %1112 = vmatpush.msra.mxu0 0.0
        %1113 = vmatpush.msra.mxu0 0.0
        %1114 = vmatpush.msra.mxu0 0.0
        %1115 = vmatpush.msra.mxu0 0.0
        %1116 = vmatpush.msra.mxu0 0.0
        %1117 = vmatpush.msra.mxu0 %v1093
        %1118 = vmatpush.msra.mxu0 %v1092
        %1119 = vmatmul.f32.gmra.mxu0 %v1101
        %v1120 = vpop.f32.mrf.mxu0
        %v1121 = vadd.f32 0.0, %v1120
        %1122 = vdwg.mxu0
        %v1124 = vsel %vm1047, %v1089, 0
        %1126 = vmatpush.msra.mxu0 0.0
        %1127 = vmatpush.msra.mxu0 0.0
        %1128 = vmatpush.msra.mxu0 0.0
        %1129 = vmatpush.msra.mxu0 0.0
        %1130 = vmatpush.msra.mxu0 0.0
        %1131 = vmatpush.msra.mxu0 0.0
        %1132 = vmatpush.msra.mxu0 0.0
        %1133 = vmatpush.msra.mxu0 0.0
        %1134 = vmatpush.msra.mxu0 0.0
        %1135 = vmatpush.msra.mxu0 0.0
        %1136 = vmatpush.msra.mxu0 0.0
        %1137 = vmatpush.msra.mxu0 0.0
        %1138 = vmatpush.msra.mxu0 0.0
        %1139 = vmatpush.msra.mxu0 0.0
        %1140 = vmatpush.msra.mxu0 %v1095
        %1141 = vmatpush.msra.mxu0 %v1094
        %1142 = vmatmul.f32.gmra.mxu0 %v1124
        %v1143 = vpop.f32.mrf.mxu0
        %v1144 = vadd.f32 0.0, %v1143
        %1145 = vdwg.mxu0
        %v1147 = vsel %vm1047, %v1090, 0
        %1149 = vmatpush.msra.mxu0 0.0
        %1150 = vmatpush.msra.mxu0 0.0
        %1151 = vmatpush.msra.mxu0 0.0
        %1152 = vmatpush.msra.mxu0 0.0
        %1153 = vmatpush.msra.mxu0 0.0
        %1154 = vmatpush.msra.mxu0 0.0
        %1155 = vmatpush.msra.mxu0 0.0
        %1156 = vmatpush.msra.mxu0 0.0
        %1157 = vmatpush.msra.mxu0 0.0
        %1158 = vmatpush.msra.mxu0 0.0
        %1159 = vmatpush.msra.mxu0 0.0
        %1160 = vmatpush.msra.mxu0 0.0
        %1161 = vmatpush.msra.mxu0 0.0
        %1162 = vmatpush.msra.mxu0 0.0
        %1163 = vmatpush.msra.mxu0 %v1097
        %1164 = vmatpush.msra.mxu0 %v1096
        %1165 = vmatmul.f32.gmra.mxu0 %v1147
        %v1166 = vpop.f32.mrf.mxu0
        %v1167 = vadd.f32 0.0, %v1166
        %1168 = vdwg.mxu0
        %v1170 = vsel %vm1047, %v1091, 0
        %1172 = vmatpush.msra.mxu0 0.0
        %1173 = vmatpush.msra.mxu0 0.0
        %1174 = vmatpush.msra.mxu0 0.0
        %1175 = vmatpush.msra.mxu0 0.0
        %1176 = vmatpush.msra.mxu0 0.0
        %1177 = vmatpush.msra.mxu0 0.0
        %1178 = vmatpush.msra.mxu0 0.0
        %1179 = vmatpush.msra.mxu0 0.0
        %1180 = vmatpush.msra.mxu0 0.0
        %1181 = vmatpush.msra.mxu0 0.0
        %1182 = vmatpush.msra.mxu0 0.0
        %1183 = vmatpush.msra.mxu0 0.0
        %1184 = vmatpush.msra.mxu0 0.0
        %1185 = vmatpush.msra.mxu0 0.0
        %1186 = vmatpush.msra.mxu0 %v1099
        %1187 = vmatpush.msra.mxu0 %v1098
        %1188 = vmatmul.f32.gmra.mxu0 %v1170
        %v1189 = vpop.f32.mrf.mxu0
        %v1190 = vadd.f32 0.0, %v1189
        %1191 = vdwg.mxu0
        %v1192 = vld [vmem:[%s9] sm:$0xff]
        %v1193 = vld [vmem:[%s9 + $0x8] sm:$0xff]
        %v1194 = vld [vmem:[%s9 + $0x10] sm:$0xff]
        %v1195 = vld [vmem:[%s9 + $0x18] sm:$0xff]
        %v1197 = vsel %vm930, %v1121, 0
        %1199 = vmatpush.msra.mxu0 0.0
        %1200 = vmatpush.msra.mxu0 0.0
        %1201 = vmatpush.msra.mxu0 0.0
        %1202 = vmatpush.msra.mxu0 0.0
        %1203 = vmatpush.msra.mxu0 0.0
        %1204 = vmatpush.msra.mxu0 0.0
        %1205 = vmatpush.msra.mxu0 0.0
        %1206 = vmatpush.msra.mxu0 0.0
        %1207 = vmatpush.msra.mxu0 0.0
        %1208 = vmatpush.msra.mxu0 0.0
        %1209 = vmatpush.msra.mxu0 0.0
        %1210 = vmatpush.msra.mxu0 0.0
        %1211 = vmatpush.msra.mxu0 0.0
        %1212 = vmatpush.msra.mxu0 0.0
        %1213 = vmatpush.msra.mxu0 0.0
        %1214 = vmatpush.msra.mxu0 %v1192
        %1215 = vmatmul.f32.gmra.mxu0 %v1197
        %v1216 = vpop.f32.mrf.mxu0
        %v1217 = vadd.f32 0.0, %v1216
        %1218 = vdwg.mxu0
        %v1220 = vsel %vm930, %v1144, 0
        %1222 = vmatpush.msra.mxu0 0.0
        %1223 = vmatpush.msra.mxu0 0.0
        %1224 = vmatpush.msra.mxu0 0.0
        %1225 = vmatpush.msra.mxu0 0.0
        %1226 = vmatpush.msra.mxu0 0.0
        %1227 = vmatpush.msra.mxu0 0.0
        %1228 = vmatpush.msra.mxu0 0.0
        %1229 = vmatpush.msra.mxu0 0.0
        %1230 = vmatpush.msra.mxu0 0.0
        %1231 = vmatpush.msra.mxu0 0.0
        %1232 = vmatpush.msra.mxu0 0.0
        %1233 = vmatpush.msra.mxu0 0.0
        %1234 = vmatpush.msra.mxu0 0.0
        %1235 = vmatpush.msra.mxu0 0.0
        %1236 = vmatpush.msra.mxu0 0.0
        %1237 = vmatpush.msra.mxu0 %v1193
        %1238 = vmatmul.f32.gmra.mxu0 %v1220
        %v1239 = vpop.f32.mrf.mxu0
        %v1240 = vadd.f32 0.0, %v1239
        %1241 = vdwg.mxu0
        %v1243 = vsel %vm930, %v1167, 0
        %1245 = vmatpush.msra.mxu0 0.0
        %1246 = vmatpush.msra.mxu0 0.0
        %1247 = vmatpush.msra.mxu0 0.0
        %1248 = vmatpush.msra.mxu0 0.0
        %1249 = vmatpush.msra.mxu0 0.0
        %1250 = vmatpush.msra.mxu0 0.0
        %1251 = vmatpush.msra.mxu0 0.0
        %1252 = vmatpush.msra.mxu0 0.0
        %1253 = vmatpush.msra.mxu0 0.0
        %1254 = vmatpush.msra.mxu0 0.0
        %1255 = vmatpush.msra.mxu0 0.0
        %1256 = vmatpush.msra.mxu0 0.0
        %1257 = vmatpush.msra.mxu0 0.0
        %1258 = vmatpush.msra.mxu0 0.0
        %1259 = vmatpush.msra.mxu0 0.0
        %1260 = vmatpush.msra.mxu0 %v1194
        %1261 = vmatmul.f32.gmra.mxu0 %v1243
        %v1262 = vpop.f32.mrf.mxu0
        %v1263 = vadd.f32 0.0, %v1262
        %1264 = vdwg.mxu0
        %v1266 = vsel %vm930, %v1190, 0
        %1268 = vmatpush.msra.mxu0 0.0
        %1269 = vmatpush.msra.mxu0 0.0
        %1270 = vmatpush.msra.mxu0 0.0
        %1271 = vmatpush.msra.mxu0 0.0
        %1272 = vmatpush.msra.mxu0 0.0
        %1273 = vmatpush.msra.mxu0 0.0
        %1274 = vmatpush.msra.mxu0 0.0
        %1275 = vmatpush.msra.mxu0 0.0
        %1276 = vmatpush.msra.mxu0 0.0
        %1277 = vmatpush.msra.mxu0 0.0
        %1278 = vmatpush.msra.mxu0 0.0
        %1279 = vmatpush.msra.mxu0 0.0
        %1280 = vmatpush.msra.mxu0 0.0
        %1281 = vmatpush.msra.mxu0 0.0
        %1282 = vmatpush.msra.mxu0 0.0
        %1283 = vmatpush.msra.mxu0 %v1195
        %1284 = vmatmul.f32.gmra.mxu0 %v1266
        %v1285 = vpop.f32.mrf.mxu0
        %v1286 = vadd.f32 0.0, %v1285
        %1287 = vdwg.mxu0
        %v1288 = vadd.f32 %v1217, %v1240
        %v1289 = vadd.f32 %v1288, %v1263
        %v1290 = vadd.f32 %v1289, %v1286
        %v1291 = vld [vmem:[%s10] sm:$0x1]
        %v1293 = vperm.slane %v1291, 0
        %v1295 = vadd.f32 %v1290, %v1293
        %v1296 = vadd.f32 %v764, %v1295
        %v1297 = vld [vmem:[%s11] sm:$0x1]
        %v1298 = vld [vmem:[%s12] sm:$0x1]
        %v1299 = vsel %vm765, %v1296, 0.0
        %1300 = vadd.xlane.f32.xlu0 %v1299
        %v1301 = vpop.xlane.xlu0 %1300
        %v1302 = vmul.f32 %v1301, %v775
        %v1303 = vsub.f32 %v1296, %v1302
        %v1304 = vmul.f32 %v1303, %v1303
        %v1305 = vsel %vm765, %v1304, 0.0
        %1306 = vadd.xlane.f32.xlu0 %v1305
        %v1307 = vpop.xlane.xlu0 %1306
        %v1308 = vmul.f32 %v1307, %v775
        %v1309 = vadd.f32 %v1308, 1e-05
        %v1310 = vrsqrt.pop %v1309
        %v1311 = vmul.f32 %v1310, %v1309
        %v1312 = vmul.f32 %v1311, %v1310
        %v1313 = vmul.f32 0.5, %v1312
        %v1314 = vsub.f32 1.5, %v1313
        %v1315 = vmul.f32 %v1310, %v1314
        %vm1316 = vweird.f32 %v1309
        %vm1317 = vweird.f32 %v1310
        %vm1318 = vmor %vm1316, %vm1317
        %v1319 = vsel %vm1318, %v1310, %v1315
        %v1320 = vmul.f32 %v1303, %v1319
        %v1322 = vperm.slane %v1297, 0
        %v1324 = vmul.f32 %v1320, %v1322
        %v1326 = vperm.slane %v1298, 0
        %v1328 = vadd.f32 %v1324, %v1326
        %v1329 = vld [vmem:[%s13] sm:$0xff]
        %v1330 = vld [vmem:[%s13 + $0x8] sm:$0xff]
        %v1331 = vld [vmem:[%s13 + $0x10] sm:$0xff]
        %v1332 = vld [vmem:[%s13 + $0x18] sm:$0xff]
        %v1333 = vld [vmem:[%s14] sm:$0x1]
        %v1335 = vperm.slane %v1333, 0
        %v1338 = vsel %vm765, %v1328, 0
        %1340 = vmatpush.msra.mxu0 0.0
        %1341 = vmatpush.msra.mxu0 0.0
        %1342 = vmatpush.msra.mxu0 0.0
        %1343 = vmatpush.msra.mxu0 0.0
        %1344 = vmatpush.msra.mxu0 0.0
        %1345 = vmatpush.msra.mxu0 0.0
        %1346 = vmatpush.msra.mxu0 0.0
        %1347 = vmatpush.msra.mxu0 0.0
        %1348 = vmatpush.msra.mxu0 0.0
        %1349 = vmatpush.msra.mxu0 0.0
        %1350 = vmatpush.msra.mxu0 0.0
        %1351 = vmatpush.msra.mxu0 0.0
        %1352 = vmatpush.msra.mxu0 %v1332
        %1353 = vmatpush.msra.mxu0 %v1331
        %1354 = vmatpush.msra.mxu0 %v1330
        %1355 = vmatpush.msra.mxu0 %v1329
        %1356 = vmatmul.f32.gmra.mxu0 %v1338
        %v1357 = vpop.f32.mrf.mxu0
        %v1358 = vadd.f32 %v1335, %v1357
        %1359 = vdwg.mxu0
        %v1360 = vmul.f32 %v1358, 0.5
        %v1361 = vmul.f32 %v1358, 0.70710677
        %v1362 = vmul.f32 %v1361, %v1361
        %v1363 = vmin.f32 16.0, %v1362
        %v1364 = vmul.f32 %v1363, 2.1237322e-06
        %v1365 = vadd.f32 %v1364, 0.00028619796
        %v1366 = vmul.f32 %v1363, %v1365
        %v1367 = vadd.f32 %v1366, 0.0036580483
        %v1368 = vmul.f32 %v1363, %v1367
        %v1369 = vadd.f32 %v1368, 0.05243302
        %v1370 = vmul.f32 %v1363, %v1369
        %v1371 = vadd.f32 %v1370, 0.18741608
        %v1372 = vmul.f32 %v1363, %v1371
        %v1373 = vadd.f32 %v1372, 1.1283791
        %v1374 = vmul.f32 %v1361, %v1373
        %v1375 = vmul.f32 %v1363, 3.8918573e-05
        %v1376 = vadd.f32 %v1375, 0.001143296
        %v1377 = vmul.f32 %v1363, %v1376
        %v1378 = vadd.f32 %v1377, 0.014752088
        %v1379 = vmul.f32 %v1363, %v1378
        %v1380 = vadd.f32 %v1379, 0.112945676
        %v1381 = vmul.f32 %v1363, %v1380
        %v1382 = vadd.f32 %v1381, 0.4994258
        %v1383 = vmul.f32 %v1363, %v1382
        %v1384 = vadd.f32 %v1383, 1.0
        %v1385 = vrcp.pop %v1384
        %v1386 = vmul.f32 %v1384, %v1385
        %v1387 = vsub.f32 1.0, %v1386
        %v1388 = vmul.f32 %v1385, %v1387
        %v1389 = vadd.f32 %v1385, %v1388
        %vm1390 = vweird.f32 %v1384
        %vm1391 = vweird.f32 %v1385
        %vm1392 = vmor %vm1390, %vm1391
        %v1393 = vsel %vm1392, %v1385, %v1389
        %v1394 = vand.u32 2147483647, %v1384
        %vm1395 = vcmp.eq.f32.partialorder %v1394, 8.507059e+37
        %v1396 = vand.u32 %v1384, 2147483648
        %v1397 = vor.u32 1.1754944e-38, %v1396
        %v1398 = vsel %vm1395, %v1397, %v1393
        %v1399 = vmul.f32 %v1374, %v1398
        %v1400 = vmin.f32 %v1399, 1.0
        %v1401 = vmax.f32 %v1400, -1.0
        %v1402 = vadd.f32 %v1401, 1.0
        %v1403 = vmul.f32 %v1360, %v1402
        %v1404 = vld [vmem:[%s15] sm:$0xff]
        %v1405 = vld [vmem:[%s15 + $0x8] sm:$0xff]
        %v1406 = vld [vmem:[%s15 + $0x10] sm:$0xff]
        %v1407 = vld [vmem:[%s15 + $0x18] sm:$0xff]
        %v1408 = vld [vmem:[%s15 + $0x20] sm:$0xff]
        %v1409 = vld [vmem:[%s15 + $0x28] sm:$0xff]
        %v1410 = vld [vmem:[%s15 + $0x30] sm:$0xff]
        %v1411 = vld [vmem:[%s15 + $0x38] sm:$0xff]
        %v1412 = vld [vmem:[%s15 + $0x40] sm:$0xff]
        %v1413 = vld [vmem:[%s15 + $0x48] sm:$0xff]
        %v1414 = vld [vmem:[%s15 + $0x50] sm:$0xff]
        %v1415 = vld [vmem:[%s15 + $0x58] sm:$0xff]
        %v1416 = vld [vmem:[%s15 + $0x60] sm:$0xff]
        %v1417 = vld [vmem:[%s15 + $0x68] sm:$0xff]
        %v1418 = vld [vmem:[%s15 + $0x70] sm:$0xff]
        %v1419 = vld [vmem:[%s15 + $0x78] sm:$0xff]
        %v1420 = vld [vmem:[%s16] sm:$0x1]
        %v1422 = vperm.slane %v1420, 0
        %1424 = vmatpush.msra.mxu0 %v1419
        %1425 = vmatpush.msra.mxu0 %v1418
        %1426 = vmatpush.msra.mxu0 %v1417
        %1427 = vmatpush.msra.mxu0 %v1416
        %1428 = vmatpush.msra.mxu0 %v1415
        %1429 = vmatpush.msra.mxu0 %v1414
        %1430 = vmatpush.msra.mxu0 %v1413
        %1431 = vmatpush.msra.mxu0 %v1412
        %1432 = vmatpush.msra.mxu0 %v1411
        %1433 = vmatpush.msra.mxu0 %v1410
        %1434 = vmatpush.msra.mxu0 %v1409
        %1435 = vmatpush.msra.mxu0 %v1408
        %1436 = vmatpush.msra.mxu0 %v1407
        %1437 = vmatpush.msra.mxu0 %v1406
        %1438 = vmatpush.msra.mxu0 %v1405
        %1439 = vmatpush.msra.mxu0 %v1404
        %1440 = vmatmul.f32.gmra.mxu0 %v1403
        %v1441 = vpop.f32.mrf.mxu0
        %v1442 = vadd.f32 %v1422, %v1441
        %1443 = vdwg.mxu0
        %v1444 = vadd.f32 %v1296, %v1442
        %1445 = vst.msk [vmem:[%s555] sm:$0xff] %vm765, %v1444
        %s1446 = sand.u32 %s415, 1
        %s1447 = scalar_lea.sflag [#allocation5], %s1446
        %s1448 = sand.u32 %s415, 1
        %s1449 = smul.addr %s1448, 8
        %s1450 = scalar_lea.vmem [#allocation4], %s1449
        // Predicated region
        $region93: #{tpu_custom_call.1} parent=87 // pred_check
          %p1451 = pneg %p425
        $region94: #{tpu_custom_call.1} parent=87 // pred_check_branch
          %1453 = sbr.rel (%p1451) target = $region96
        $region95: #{tpu_custom_call.1} parent=87 // pred_region
          %1455 = vsyncadd %s1447, 0
          %s1456 = smul.addr %s35, 2
          %s1457 = sadd.s32 %s36, %s1456
          %s1458 = smul.addr %s1457, 8
          %s1459 = scalar_lea.hbm %s17, %s1458
          %s1461 = sshll.u32 %s1450, 4
          %s1462 = int_to_ptr.vmem [resolvable:$true] %s1461
          %s1463 = sshll.u32 %s1459, 4
          %s1464 = int_to_ptr.hbm [resolvable:$true] %s1463
          %1466 = dma.vmem_to_hbm [thread:$0]  %s1462, 128, %s1464, %s1447
        $region96: #{tpu_custom_call.1} parent=87 // pred_fallthru
          _
      $region88: #{tpu_custom_call.1} parent=5 // pred_fallthru
        _
      %p1467 = scmp.le.s32.totalorder 2, %s26
      // Predicated region
      $region97: #{tpu_custom_call.1} parent=5 // pred_check
        %p1468 = pneg %p1467
      $region98: #{tpu_custom_call.1} parent=5 // pred_check_branch
        %1470 = sbr.rel (%p1468) target = $region100
      $region99: #{tpu_custom_call.1} parent=5 // pred_region
        %s1471 = ssub.s32 %s26, 2
        // Predicated region
        $region101: #{tpu_custom_call.1} parent=99 // pred_check
          %p1472 = pneg %p431
        $region102: #{tpu_custom_call.1} parent=99 // pred_check_branch
          %1474 = sbr.rel (%p1472) target = $region104
        $region103: #{tpu_custom_call.1} parent=99 // pred_region
          %s1475 = sand.u32 %s416, 1
          %s1476 = scalar_lea.sflag [#allocation5], %s1475
          %s1477 = sand.u32 %s416, 1
          %s1478 = smul.addr %s1477, 8
          %s1479 = scalar_lea.vmem [#allocation4], %s1478
          %1481 = dma.done %s1476, 128
        $region104: #{tpu_custom_call.1} parent=99 // pred_fallthru
          _
      $region100: #{tpu_custom_call.1} parent=5 // pred_fallthru
        _
    $region6: #{tpu_custom_call.1} parent=1 // loop_footer
      %s30 = sadd.s32 1, %s26
    $region7: #{tpu_custom_call.1} parent=1 // loop_footer_branch
      %25 = sbr.rel target = $region3
    $region8: #{tpu_custom_call.1} parent=1 // loop_exit
      _
    %1482 = vsyncpa [#allocation5], 1
    %s1483 = scalar_lea.sflag [#allocation5], 1
    %1484 = vsyncpa %s1483, 1

</llo_original>
